<compile_context>
chip_gen: v5e
topology: v5e:2x2
jax: 0.10.0
libtpu: 0.0.40
codegen_flags: <defaults>
</compile_context>

<pallas_src>
import jax
import jax.numpy as jnp
from jax import lax
from jax.experimental import pallas as pl
from jax.experimental.pallas import tpu as pltpu


def _layernorm(z, gamma, beta, eps=1e-5):
    mu = jnp.mean(z, axis=-1, keepdims=True)
    var = jnp.mean((z - mu) ** 2, axis=-1, keepdims=True)
    return (z - mu) * lax.rsqrt(var + eps) * gamma + beta


def transformer_block_kernel(
    x_ref,      # (T, E)      f32   rows of the current batch element
    mask_ref,   # (1, T)      f32   key-padding mask (1.0 = valid)
    wqkv_ref,   # (3H, E, E)  bf16  head-major fused QKV (scale folded into Wq)
    wu_ref,     # (H, E, E)   bf16  head-major unify weight
    w1_ref,     # (E, FFH)    bf16
    w2_ref,     # (FFH, E)    bf16
    vecs_ref,   # (6, E)      f32   packed [bu, g1, be1, bf2, g2, be2]
    bf1_ref,    # (1, FFH)    f32
    out_ref,    # (T, E)      f32
):
    T, E = x_ref.shape
    H = wu_ref.shape[0]
    bf16 = jnp.bfloat16
    f32 = jnp.float32

    x = x_ref[...]                               # (T, E) f32 (residual / LN)
    valid = mask_ref[...] > 0.0                  # (1, T)

    vecs = vecs_ref[...]                         # (6, E)
    bu, g1, be1 = vecs[0:1], vecs[1:2], vecs[2:3]
    bf2, g2, be2 = vecs[3:4], vecs[4:5], vecs[5:6]

    # ---- fused head-major QKV projection: one batched MXU matmul ----------
    x3 = jnp.broadcast_to(x.astype(bf16), (3 * H, T, E))        # cheap bcast
    qkv = lax.dot_general(x3, wqkv_ref[...],
                          (((2,), (1,)), ((0,), (0,))),
                          preferred_element_type=f32)            # (3H, T, E)
    qkv = qkv.astype(bf16)                       # single convert pass
    q = qkv[0:H]                                 # leading-dim slices: no lane
    k = qkv[H:2 * H]                             # masking / relayout
    v = qkv[2 * H:3 * H]

    # ---- attention: all heads batched --------------------------------------
    s = lax.dot_general(q, k, (((2,), (2,)), ((0,), (0,))),
                        preferred_element_type=f32)              # (H, T, T)
    s = jnp.where(valid[None], s, jnp.float32(-1e30))            # key padding
    m = jnp.max(s, axis=-1, keepdims=True)
    p = jnp.exp(s - m)
    attn = p * pl.reciprocal(jnp.sum(p, axis=-1, keepdims=True), approx=True)
    o = lax.dot_general(attn.astype(bf16), v,
                        (((2,), (1,)), ((0,), (0,))),
                        preferred_element_type=f32)              # (H, T, E)

    # ---- unify heads: batched per-head matmul, reduced over heads ----------
    u = lax.dot_general(o.astype(bf16), wu_ref[...],
                        (((2,), (1,)), ((0,), (0,))),
                        preferred_element_type=f32)              # (H, T, E)
    attended = jnp.sum(u, axis=0) + bu                           # (T, E)

    # ---- residual + LayerNorm 1 (dropout p = 0.0 -> identity) --------------
    x1 = _layernorm(attended + x, g1, be1)

    # ---- feed-forward: Linear(E,4E) -> ReLU -> Linear(4E,E) ----------------
    h1 = jnp.dot(x1.astype(bf16), w1_ref[...],
                 preferred_element_type=f32) + bf1_ref[...]
    h1 = jnp.maximum(h1, 0.0)
    ff = jnp.dot(h1.astype(bf16), w2_ref[...],
                 preferred_element_type=f32) + bf2

    # ---- residual + LayerNorm 2, single full-tile store ---------------------
    out_ref[...] = _layernorm(ff + x1, g2, be2)
    # TODO(synk): on v5e, a lane-packed (row-folded) output layout would make
    # this an unmasked vst; kept the natural (T, E) layout for simplicity.


def transformer_block(x, mask, params, *, heads):
    B, T, E = x.shape
    H = heads
    (wq, wk, wv, wu, bu, g1, be1, w1, bf1, w2, bf2, g2, be2) = params
    FFH = w1.shape[1]
    bf16 = jnp.bfloat16

    # Head-major weight prep (one-time, wrapper-side, pure JAX).
    def head_major(w):                            # (E, H*E) -> (H, E_in, E_out)
        return w.reshape(E, H, E).transpose(1, 0, 2)

    scale = jnp.float32(E) ** jnp.float32(-0.5)   # full softmax scale on Wq
    wqkv_h = jnp.concatenate(
        [head_major(wq * scale), head_major(wk), head_major(wv)],
        axis=0).astype(bf16)                      # (3H, E, E)
    wu_h = wu.reshape(H, E, E).astype(bf16)       # (H, E, E)
    w1_b = w1.astype(bf16)
    w2_b = w2.astype(bf16)
    vecs = jnp.concatenate([bu, g1, be1, bf2, g2, be2], axis=0)   # (6, E) f32

    in_specs = [
        pl.BlockSpec((None, T, E), lambda b: (b, 0, 0)),      # x (per batch)
        pl.BlockSpec((None, 1, T), lambda b: (b, 0, 0)),      # mask (per batch)
        pl.BlockSpec((3 * H, E, E), lambda b: (0, 0, 0)),     # Wqkv (resident)
        pl.BlockSpec((H, E, E), lambda b: (0, 0, 0)),         # W_unify (resident)
        pl.BlockSpec((E, FFH), lambda b: (0, 0)),             # ff W1 (resident)
        pl.BlockSpec((FFH, E), lambda b: (0, 0)),             # ff W2 (resident)
        pl.BlockSpec((6, E), lambda b: (0, 0)),               # packed vecs
        pl.BlockSpec((1, FFH), lambda b: (0, 0)),             # ff b1
    ]
    out_specs = pl.BlockSpec((None, T, E), lambda b: (b, 0, 0))

    flops = (2 * B * (3 * H) * T * E * E          # fused QKV projection
             + 2 * B * H * T * T * E * 2          # logits + attn @ V
             + 2 * B * H * T * E * E              # unify
             + 2 * B * T * E * FFH * 2)           # feed-forward
    transcendentals = B * H * T * T + B * H * T + 4 * B * T
    bytes_accessed = (x.size * 4 * 2 + mask.size * 4
                      + (wqkv_h.size + wu_h.size + w1_b.size + w2_b.size) * 2
                      + (vecs.size + bf1.size) * 4)

    out = pl.pallas_call(
        transformer_block_kernel,
        out_shape=jax.ShapeDtypeStruct((B, T, E), jnp.float32),
        grid=(B,),
        in_specs=in_specs,
        out_specs=out_specs,
        compiler_params=pltpu.CompilerParams(
            dimension_semantics=("parallel",),     # v7x: shard across 2 TCs
            vmem_limit_bytes=32 * 1024 * 1024),    # ample; safe on 64 MiB v7x
        cost_estimate=pl.CostEstimate(
            flops=flops,
            transcendentals=transcendentals,
            bytes_accessed=bytes_accessed),
    )(x, mask, wqkv_h, wu_h, w1_b, w2_b, vecs, bf1)
    return out


def reference_block(x, mask, params, *, heads):
    """Pure-JAX f32 reference for verification."""
    (wq, wk, wv, wu, bu, g1, be1, w1, bf1, w2, bf2, g2, be2) = params
    B, T, E = x.shape
    H = heads
    scale = E ** -0.25
    q = (x @ wq) * scale
    k = (x @ wk) * scale
    v = x @ wv
    q = q.reshape(B, T, H, E).transpose(0, 2, 1, 3)
    k = k.reshape(B, T, H, E).transpose(0, 2, 1, 3)
    v = v.reshape(B, T, H, E).transpose(0, 2, 1, 3)
    logits = jnp.einsum("bhqe,bhke->bhqk", q, k)
    valid = (mask > 0.0)[:, :, None, :]                      # (B, 1, 1, T)
    logits = jnp.where(valid, logits, -1e30)
    attn = jax.nn.softmax(logits, axis=-1)
    out = jnp.einsum("bhqk,bhke->bhqe", attn, v)
    out = out.transpose(0, 2, 1, 3).reshape(B, T, H * E)
    attended = out @ wu + bu

    def ln(z, g, b):
        mu = jnp.mean(z, -1, keepdims=True)
        var = jnp.mean((z - mu) ** 2, -1, keepdims=True)
        return (z - mu) / jnp.sqrt(var + 1e-5) * g + b

    x1 = ln(attended + x, g1, be1)
    ff = jnp.maximum(x1 @ w1 + bf1, 0.0) @ w2 + bf2
    return ln(ff + x1, g2, be2)


if __name__ == "__main__":
    B, T, E, H = 2, 8, 32, 4
    FF = 4 * E

    key = jax.random.PRNGKey(0)
    ks = jax.random.split(key, 12)

    f32 = jnp.float32
    x = jax.random.normal(ks[0], (B, T, E), f32)
    # key-padding mask: first batch fully valid, second has last 3 keys masked
    mask = jnp.ones((B, 1, T), f32).at[1, 0, T - 3:].set(0.0)

    s = 0.05
    wq = jax.random.normal(ks[1], (E, H * E), f32) * s
    wk = jax.random.normal(ks[2], (E, H * E), f32) * s
    wv = jax.random.normal(ks[3], (E, H * E), f32) * s
    wu = jax.random.normal(ks[4], (H * E, E), f32) * s
    bu = jax.random.normal(ks[5], (1, E), f32) * s
    g1 = jnp.ones((1, E), f32)
    be1 = jnp.zeros((1, E), f32)
    w1 = jax.random.normal(ks[6], (E, FF), f32) * s
    bf1 = jax.random.normal(ks[7], (1, FF), f32) * s
    w2 = jax.random.normal(ks[8], (FF, E), f32) * s
    bf2 = jax.random.normal(ks[9], (1, E), f32) * s
    g2 = jnp.ones((1, E), f32)
    be2 = jnp.zeros((1, E), f32)

    params = (wq, wk, wv, wu, bu, g1, be1, w1, bf1, w2, bf2, g2, be2)

    out = transformer_block(x, mask, params, heads=H)
    out = jax.block_until_ready(out)

    ref = reference_block(x, mask, params, heads=H)
    assert out.shape == (B, T, E)
    # bf16 MXU operands + approx reciprocal -> compare against the f32 reference
    # with a correspondingly relaxed tolerance.
    assert jnp.allclose(out, ref, atol=3e-2, rtol=3e-2), "mismatch vs JAX reference"

    print("KERNEL_OK")
</pallas_src>

<mosaic_0001>
module attributes {stable_mosaic.version = 11 : i64} {
  func.func @transformer_block_kernel(%arg0: i32, %arg1: memref<1x8x32xf32, #tpu.memory_space<vmem>>, %arg2: memref<1x1x8xf32, #tpu.memory_space<vmem>>, %arg3: memref<12x32x32xbf16, #tpu.memory_space<vmem>>, %arg4: memref<4x32x32xbf16, #tpu.memory_space<vmem>>, %arg5: memref<32x128xbf16, #tpu.memory_space<vmem>>, %arg6: memref<128x32xbf16, #tpu.memory_space<vmem>>, %arg7: memref<6x32xf32, #tpu.memory_space<vmem>>, %arg8: memref<1x128xf32, #tpu.memory_space<vmem>>, %arg9: memref<1x8x32xf32, #tpu.memory_space<vmem>>) attributes {dimension_semantics = [#tpu.dimension_semantics<parallel>], iteration_bounds = array<i64: 2>, scalar_prefetch = 0 : i64, scratch_operands = 0 : i64, tpu.core_type = #tpu.core_type<tc>, window_params = [{transform_indices = @transform_0, window_bounds = array<i64: 1, 8, 32>}, {transform_indices = @transform_1, window_bounds = array<i64: 1, 1, 8>}, {pipeline_mode = #tpu.pipeline_mode<synchronous>, transform_indices = @transform_2, window_bounds = array<i64: 12, 32, 32>}, {pipeline_mode = #tpu.pipeline_mode<synchronous>, transform_indices = @transform_3, window_bounds = array<i64: 4, 32, 32>}, {pipeline_mode = #tpu.pipeline_mode<synchronous>, transform_indices = @transform_4, window_bounds = array<i64: 32, 128>}, {pipeline_mode = #tpu.pipeline_mode<synchronous>, transform_indices = @transform_5, window_bounds = array<i64: 128, 32>}, {pipeline_mode = #tpu.pipeline_mode<synchronous>, transform_indices = @transform_6, window_bounds = array<i64: 6, 32>}, {pipeline_mode = #tpu.pipeline_mode<synchronous>, transform_indices = @transform_7, window_bounds = array<i64: 1, 128>}, {transform_indices = @transform_8, window_bounds = array<i64: 1, 8, 32>}]} {
    %c0 = arith.constant 0 : index
    %c0_0 = arith.constant 0 : index
    %c0_1 = arith.constant 0 : index
    %0 = vector.load %arg1[%c0, %c0_0, %c0_1] : memref<1x8x32xf32, #tpu.memory_space<vmem>>, vector<1x8x32xf32>
    %1 = vector.shape_cast %0 : vector<1x8x32xf32> to vector<8x32xf32>
    %c0_2 = arith.constant 0 : index
    %c0_3 = arith.constant 0 : index
    %c0_4 = arith.constant 0 : index
    %2 = vector.load %arg2[%c0_2, %c0_3, %c0_4] : memref<1x1x8xf32, #tpu.memory_space<vmem>>, vector<1x1x8xf32>
    %3 = vector.shape_cast %2 : vector<1x1x8xf32> to vector<1x8xf32>
    %cst = arith.constant 0.000000e+00 : f32
    %4 = vector.broadcast %cst : f32 to vector<1x8xf32>
    %5 = arith.cmpf ogt, %3, %4 : vector<1x8xf32>
    %c0_5 = arith.constant 0 : index
    %c0_6 = arith.constant 0 : index
    %6 = vector.load %arg7[%c0_5, %c0_6] : memref<6x32xf32, #tpu.memory_space<vmem>>, vector<6x32xf32>
    %7 = vector.extract_strided_slice %6 {offsets = [0, 0], sizes = [1, 32], strides = [1, 1]} : vector<6x32xf32> to vector<1x32xf32>
    %8 = vector.extract_strided_slice %6 {offsets = [1, 0], sizes = [1, 32], strides = [1, 1]} : vector<6x32xf32> to vector<1x32xf32>
    %9 = vector.extract_strided_slice %6 {offsets = [2, 0], sizes = [1, 32], strides = [1, 1]} : vector<6x32xf32> to vector<1x32xf32>
    %10 = vector.extract_strided_slice %6 {offsets = [3, 0], sizes = [1, 32], strides = [1, 1]} : vector<6x32xf32> to vector<1x32xf32>
    %11 = vector.extract_strided_slice %6 {offsets = [4, 0], sizes = [1, 32], strides = [1, 1]} : vector<6x32xf32> to vector<1x32xf32>
    %12 = vector.extract_strided_slice %6 {offsets = [5, 0], sizes = [1, 32], strides = [1, 1]} : vector<6x32xf32> to vector<1x32xf32>
    %13 = arith.truncf %1 : vector<8x32xf32> to vector<8x32xbf16>
    %14 = vector.shape_cast %13 : vector<8x32xbf16> to vector<1x8x32xbf16>
    %15 = vector.broadcast %14 : vector<1x8x32xbf16> to vector<12x8x32xbf16>
    %c0_7 = arith.constant 0 : index
    %c0_8 = arith.constant 0 : index
    %c0_9 = arith.constant 0 : index
    %16 = vector.load %arg3[%c0_7, %c0_8, %c0_9] : memref<12x32x32xbf16, #tpu.memory_space<vmem>>, vector<12x32x32xbf16>
    %cst_10 = arith.constant dense<0.000000e+00> : vector<12x8x32xf32>
    %17 = tpu.matmul %15, %16, %cst_10 {dimension_numbers = #tpu.dot_dimension_numbers<[2], [1], [1], [2], [0, 0, 0, 1, 1, 2], [0], [0]>} : vector<12x8x32xbf16>, vector<12x32x32xbf16>, vector<12x8x32xf32> -> vector<12x8x32xf32>
    %18 = arith.truncf %17 : vector<12x8x32xf32> to vector<12x8x32xbf16>
    %19 = vector.extract_strided_slice %18 {offsets = [0, 0, 0], sizes = [4, 8, 32], strides = [1, 1, 1]} : vector<12x8x32xbf16> to vector<4x8x32xbf16>
    %20 = vector.extract_strided_slice %18 {offsets = [4, 0, 0], sizes = [4, 8, 32], strides = [1, 1, 1]} : vector<12x8x32xbf16> to vector<4x8x32xbf16>
    %21 = vector.extract_strided_slice %18 {offsets = [8, 0, 0], sizes = [4, 8, 32], strides = [1, 1, 1]} : vector<12x8x32xbf16> to vector<4x8x32xbf16>
    %cst_11 = arith.constant dense<0.000000e+00> : vector<4x8x8xf32>
    %22 = tpu.matmul %19, %20, %cst_11 {dimension_numbers = #tpu.dot_dimension_numbers<[2], [2], [1], [1], [0, 0, 0, 1, 1, 1], [0], [0]>} : vector<4x8x32xbf16>, vector<4x8x32xbf16>, vector<4x8x8xf32> -> vector<4x8x8xf32>
    %23 = vector.shape_cast %5 : vector<1x8xi1> to vector<1x1x8xi1>
    %cst_12 = arith.constant -1.000000e+30 : f32
    %24 = vector.shape_cast %23 : vector<1x1x8xi1> to vector<1x1x8xi1>
    %25 = vector.broadcast %24 : vector<1x1x8xi1> to vector<4x8x8xi1>
    %26 = vector.broadcast %cst_12 : f32 to vector<4x8x8xf32>
    %27 = arith.select %25, %22, %26 : vector<4x8x8xi1>, vector<4x8x8xf32>
    %cst_13 = arith.constant dense<0xFF800000> : vector<4x8xf32>
    %28 = vector.multi_reduction <maximumf>, %27, %cst_13 [2] : vector<4x8x8xf32> to vector<4x8xf32>
    %29 = vector.shape_cast %28 : vector<4x8xf32> to vector<4x8x1xf32>
    %30 = vector.broadcast %29 : vector<4x8x1xf32> to vector<4x8x8xf32>
    %31 = arith.subf %27, %30 : vector<4x8x8xf32>
    %32 = math.exp %31 : vector<4x8x8xf32>
    %cst_14 = arith.constant dense<0.000000e+00> : vector<4x8xf32>
    %33 = vector.multi_reduction <add>, %32, %cst_14 [2] : vector<4x8x8xf32> to vector<4x8xf32>
    %34 = vector.shape_cast %33 : vector<4x8xf32> to vector<4x8x1xf32>
    %35 = tpu.reciprocal %34 {approx = true} : vector<4x8x1xf32> -> vector<4x8x1xf32>
    %36 = vector.broadcast %35 : vector<4x8x1xf32> to vector<4x8x8xf32>
    %37 = arith.mulf %32, %36 : vector<4x8x8xf32>
    %38 = arith.truncf %37 : vector<4x8x8xf32> to vector<4x8x8xbf16>
    %cst_15 = arith.constant dense<0.000000e+00> : vector<4x8x32xf32>
    %39 = tpu.matmul %38, %21, %cst_15 {dimension_numbers = #tpu.dot_dimension_numbers<[2], [1], [1], [2], [0, 0, 0, 1, 1, 2], [0], [0]>} : vector<4x8x8xbf16>, vector<4x8x32xbf16>, vector<4x8x32xf32> -> vector<4x8x32xf32>
    %40 = arith.truncf %39 : vector<4x8x32xf32> to vector<4x8x32xbf16>
    %c0_16 = arith.constant 0 : index
    %c0_17 = arith.constant 0 : index
    %c0_18 = arith.constant 0 : index
    %41 = vector.load %arg4[%c0_16, %c0_17, %c0_18] : memref<4x32x32xbf16, #tpu.memory_space<vmem>>, vector<4x32x32xbf16>
    %cst_19 = arith.constant dense<0.000000e+00> : vector<4x8x32xf32>
    %42 = tpu.matmul %40, %41, %cst_19 {dimension_numbers = #tpu.dot_dimension_numbers<[2], [1], [1], [2], [0, 0, 0, 1, 1, 2], [0], [0]>} : vector<4x8x32xbf16>, vector<4x32x32xbf16>, vector<4x8x32xf32> -> vector<4x8x32xf32>
    %cst_20 = arith.constant dense<0.000000e+00> : vector<8x32xf32>
    %43 = vector.multi_reduction <add>, %42, %cst_20 [0] : vector<4x8x32xf32> to vector<8x32xf32>
    %44 = vector.broadcast %7 : vector<1x32xf32> to vector<8x32xf32>
    %45 = arith.addf %43, %44 : vector<8x32xf32>
    %46 = arith.addf %45, %1 : vector<8x32xf32>
    %cst_21 = arith.constant dense<0.000000e+00> : vector<8xf32>
    %47 = vector.multi_reduction <add>, %46, %cst_21 [1] : vector<8x32xf32> to vector<8xf32>
    %48 = vector.shape_cast %47 : vector<8xf32> to vector<8x1xf32>
    %cst_22 = arith.constant 3.200000e+01 : f32
    %49 = vector.broadcast %cst_22 : f32 to vector<8x1xf32>
    %50 = arith.divf %48, %49 : vector<8x1xf32>
    %51 = vector.broadcast %50 : vector<8x1xf32> to vector<8x32xf32>
    %52 = arith.subf %46, %51 : vector<8x32xf32>
    %53 = arith.mulf %52, %52 : vector<8x32xf32>
    %cst_23 = arith.constant dense<0.000000e+00> : vector<8xf32>
    %54 = vector.multi_reduction <add>, %53, %cst_23 [1] : vector<8x32xf32> to vector<8xf32>
    %55 = vector.shape_cast %54 : vector<8xf32> to vector<8x1xf32>
    %cst_24 = arith.constant 3.200000e+01 : f32
    %56 = vector.broadcast %cst_24 : f32 to vector<8x1xf32>
    %57 = arith.divf %55, %56 : vector<8x1xf32>
    %58 = vector.broadcast %50 : vector<8x1xf32> to vector<8x32xf32>
    %59 = arith.subf %46, %58 : vector<8x32xf32>
    %cst_25 = arith.constant 9.99999974E-6 : f32
    %60 = vector.broadcast %cst_25 : f32 to vector<8x1xf32>
    %61 = arith.addf %57, %60 : vector<8x1xf32>
    %62 = math.rsqrt %61 : vector<8x1xf32>
    %63 = vector.broadcast %62 : vector<8x1xf32> to vector<8x32xf32>
    %64 = arith.mulf %59, %63 : vector<8x32xf32>
    %65 = vector.broadcast %8 : vector<1x32xf32> to vector<8x32xf32>
    %66 = arith.mulf %64, %65 : vector<8x32xf32>
    %67 = vector.broadcast %9 : vector<1x32xf32> to vector<8x32xf32>
    %68 = arith.addf %66, %67 : vector<8x32xf32>
    %69 = arith.truncf %68 : vector<8x32xf32> to vector<8x32xbf16>
    %c0_26 = arith.constant 0 : index
    %c0_27 = arith.constant 0 : index
    %70 = vector.load %arg5[%c0_26, %c0_27] : memref<32x128xbf16, #tpu.memory_space<vmem>>, vector<32x128xbf16>
    %cst_28 = arith.constant dense<0.000000e+00> : vector<8x128xf32>
    %71 = tpu.matmul %69, %70, %cst_28 {dimension_numbers = #tpu.dot_dimension_numbers<[1], [0], [0], [1], [0, 0, 1, 1], [], []>} : vector<8x32xbf16>, vector<32x128xbf16>, vector<8x128xf32> -> vector<8x128xf32>
    %c0_29 = arith.constant 0 : index
    %c0_30 = arith.constant 0 : index
    %72 = vector.load %arg8[%c0_29, %c0_30] : memref<1x128xf32, #tpu.memory_space<vmem>>, vector<1x128xf32>
    %73 = vector.broadcast %72 : vector<1x128xf32> to vector<8x128xf32>
    %74 = arith.addf %71, %73 : vector<8x128xf32>
    %cst_31 = arith.constant 0.000000e+00 : f32
    %75 = vector.broadcast %cst_31 : f32 to vector<8x128xf32>
    %76 = arith.maximumf %74, %75 : vector<8x128xf32>
    %77 = arith.truncf %76 : vector<8x128xf32> to vector<8x128xbf16>
    %c0_32 = arith.constant 0 : index
    %c0_33 = arith.constant 0 : index
    %78 = vector.load %arg6[%c0_32, %c0_33] : memref<128x32xbf16, #tpu.memory_space<vmem>>, vector<128x32xbf16>
    %cst_34 = arith.constant dense<0.000000e+00> : vector<8x32xf32>
    %79 = tpu.matmul %77, %78, %cst_34 {dimension_numbers = #tpu.dot_dimension_numbers<[1], [0], [0], [1], [0, 0, 1, 1], [], []>} : vector<8x128xbf16>, vector<128x32xbf16>, vector<8x32xf32> -> vector<8x32xf32>
    %80 = vector.broadcast %10 : vector<1x32xf32> to vector<8x32xf32>
    %81 = arith.addf %79, %80 : vector<8x32xf32>
    %82 = arith.addf %81, %68 : vector<8x32xf32>
    %cst_35 = arith.constant dense<0.000000e+00> : vector<8xf32>
    %83 = vector.multi_reduction <add>, %82, %cst_35 [1] : vector<8x32xf32> to vector<8xf32>
    %84 = vector.shape_cast %83 : vector<8xf32> to vector<8x1xf32>
    %cst_36 = arith.constant 3.200000e+01 : f32
    %85 = vector.broadcast %cst_36 : f32 to vector<8x1xf32>
    %86 = arith.divf %84, %85 : vector<8x1xf32>
    %87 = vector.broadcast %86 : vector<8x1xf32> to vector<8x32xf32>
    %88 = arith.subf %82, %87 : vector<8x32xf32>
    %89 = arith.mulf %88, %88 : vector<8x32xf32>
    %cst_37 = arith.constant dense<0.000000e+00> : vector<8xf32>
    %90 = vector.multi_reduction <add>, %89, %cst_37 [1] : vector<8x32xf32> to vector<8xf32>
    %91 = vector.shape_cast %90 : vector<8xf32> to vector<8x1xf32>
    %cst_38 = arith.constant 3.200000e+01 : f32
    %92 = vector.broadcast %cst_38 : f32 to vector<8x1xf32>
    %93 = arith.divf %91, %92 : vector<8x1xf32>
    %94 = vector.broadcast %86 : vector<8x1xf32> to vector<8x32xf32>
    %95 = arith.subf %82, %94 : vector<8x32xf32>
    %cst_39 = arith.constant 9.99999974E-6 : f32
    %96 = vector.broadcast %cst_39 : f32 to vector<8x1xf32>
    %97 = arith.addf %93, %96 : vector<8x1xf32>
    %98 = math.rsqrt %97 : vector<8x1xf32>
    %99 = vector.broadcast %98 : vector<8x1xf32> to vector<8x32xf32>
    %100 = arith.mulf %95, %99 : vector<8x32xf32>
    %101 = vector.broadcast %11 : vector<1x32xf32> to vector<8x32xf32>
    %102 = arith.mulf %100, %101 : vector<8x32xf32>
    %103 = vector.broadcast %12 : vector<1x32xf32> to vector<8x32xf32>
    %104 = arith.addf %102, %103 : vector<8x32xf32>
    %c0_40 = arith.constant 0 : index
    %c0_41 = arith.constant 0 : index
    %c0_42 = arith.constant 0 : index
    %105 = vector.load %arg9[%c0_40, %c0_41, %c0_42] : memref<1x8x32xf32, #tpu.memory_space<vmem>>, vector<1x8x32xf32>
    %106 = vector.shape_cast %105 : vector<1x8x32xf32> to vector<8x32xf32>
    %107 = vector.shape_cast %104 : vector<8x32xf32> to vector<1x8x32xf32>
    tpu.vector_store %arg9[%c0_40, %c0_41, %c0_42], %107 {strides = array<i32>} : memref<1x8x32xf32, #tpu.memory_space<vmem>>, vector<1x8x32xf32>,
    return
  }
  func.func @transform_0(%arg0: i32) -> (i32, i32, i32) {
    %c0_i32 = arith.constant 0 : i32
    %c0_i32_0 = arith.constant 0 : i32
    %c0_i32_1 = arith.constant 0 : i32
    return %arg0, %c0_i32, %c0_i32_0 : i32, i32, i32
  }
  func.func @transform_1(%arg0: i32) -> (i32, i32, i32) {
    %c0_i32 = arith.constant 0 : i32
    %c0_i32_0 = arith.constant 0 : i32
    %c0_i32_1 = arith.constant 0 : i32
    return %arg0, %c0_i32, %c0_i32_0 : i32, i32, i32
  }
  func.func @transform_2(%arg0: i32) -> (i32, i32, i32) {
    %c0_i32 = arith.constant 0 : i32
    %c0_i32_0 = arith.constant 0 : i32
    %c0_i32_1 = arith.constant 0 : i32
    %c0_i32_2 = arith.constant 0 : i32
    return %c0_i32, %c0_i32_0, %c0_i32_1 : i32, i32, i32
  }
  func.func @transform_3(%arg0: i32) -> (i32, i32, i32) {
    %c0_i32 = arith.constant 0 : i32
    %c0_i32_0 = arith.constant 0 : i32
    %c0_i32_1 = arith.constant 0 : i32
    %c0_i32_2 = arith.constant 0 : i32
    return %c0_i32, %c0_i32_0, %c0_i32_1 : i32, i32, i32
  }
  func.func @transform_4(%arg0: i32) -> (i32, i32) {
    %c0_i32 = arith.constant 0 : i32
    %c0_i32_0 = arith.constant 0 : i32
    %c0_i32_1 = arith.constant 0 : i32
    return %c0_i32, %c0_i32_0 : i32, i32
  }
  func.func @transform_5(%arg0: i32) -> (i32, i32) {
    %c0_i32 = arith.constant 0 : i32
    %c0_i32_0 = arith.constant 0 : i32
    %c0_i32_1 = arith.constant 0 : i32
    return %c0_i32, %c0_i32_0 : i32, i32
  }
  func.func @transform_6(%arg0: i32) -> (i32, i32) {
    %c0_i32 = arith.constant 0 : i32
    %c0_i32_0 = arith.constant 0 : i32
    %c0_i32_1 = arith.constant 0 : i32
    return %c0_i32, %c0_i32_0 : i32, i32
  }
  func.func @transform_7(%arg0: i32) -> (i32, i32) {
    %c0_i32 = arith.constant 0 : i32
    %c0_i32_0 = arith.constant 0 : i32
    %c0_i32_1 = arith.constant 0 : i32
    return %c0_i32, %c0_i32_0 : i32, i32
  }
  func.func @transform_8(%arg0: i32) -> (i32, i32, i32) {
    %c0_i32 = arith.constant 0 : i32
    %c0_i32_0 = arith.constant 0 : i32
    %c0_i32_1 = arith.constant 0 : i32
    return %arg0, %c0_i32, %c0_i32_0 : i32, i32, i32
  }
}

</mosaic_0001>

<llo_original>
// kernel: tpu_custom_call.1
$region0: #{tpu_custom_call.1}
  #allocation0 [shape = 'u32[]', space=smem, size = 0x4, offset = 0x4, fixed_abs, tag = 'smem constant byte address 0x4 - core index']
  #allocation1 [shape = 'u32[72,128]{1,0:T(1,128)}', space=vmem, size = 0x9000, scoped, tag = 'internal scratch']
  %s0 = inlined_call_operand.vmem [shape: f32[2,8,32], index: 0, kind: input, shape index: {}]
  %s1 = inlined_call_operand.vmem [shape: f32[2,1,8], index: 1, kind: input, shape index: {}]
  %s2 = inlined_call_operand.hbm [shape: bf16[12,32,32], index: 2, kind: input, shape index: {}]
  %s3 = inlined_call_operand.vmem [shape: bf16[4,32,32], index: 3, kind: input, shape index: {}]
  %s4 = inlined_call_operand.hbm [shape: bf16[32,128], index: 4, kind: input, shape index: {}]
  %s5 = inlined_call_operand.vmem [shape: bf16[128,32], index: 5, kind: input, shape index: {}]
  %s6 = inlined_call_operand.hbm [shape: f32[6,32], index: 6, kind: input, shape index: {}]
  %s7 = inlined_call_operand.vmem [shape: f32[1,128], index: 7, kind: input, shape index: {}]
  %s8 = inlined_call_operand.hbm [shape: f32[2,8,32], index: 8, kind: output, shape index: {}]
  %s9 = sld [smem:[#allocation0]]
  $region77: #{tpu_custom_call.1} parent=0
    _
  %s11 = ssub.s32 1, %s9
  %s12 = scalar_select 0, %s11, %s9
  $region1: #{tpu_custom_call.1} parent=0
    #allocation2 [shape = 'u8[98304]{0}', space=vmem, size = 0x18000, scoped, tag = 'input window, operand 2, single buffered']
    #allocation3 [shape = 's32[2]{0}', space=sflag, size = 0x8, scoped, tag = 'scoped memory for tpu_custom_call.1']
    #allocation4 [shape = 's32[2]{0}', space=sflag, size = 0x8, scoped, tag = 'scoped memory for tpu_custom_call.1']
    #allocation5 [shape = 'u8[8192]{0}', space=vmem, size = 0x2000, scoped, tag = 'input window, operand 4, single buffered']
    #allocation6 [shape = 's32[1]{0}', space=sflag, size = 0x4, scoped, tag = 'scoped memory for tpu_custom_call.1']
    #allocation7 [shape = 'u8[4096]{0}', space=vmem, size = 0x1000, scoped, tag = 'input window, operand 6, single buffered']
    #allocation8 [shape = 'u8[8192]{0}', space=vmem, size = 0x2000, scoped, tag = 'output window, operand 0']
    %13 = vsyncpa [#allocation3], 0
    %14 = vsyncpa [#allocation6], 0
    %15 = vsyncpa [#allocation4], 0
    %s16 = scalar_lea.sflag [#allocation4], 1
    %17 = vsyncpa %s16, 0
    loop: start=0, step=1, limit=4
    $region2: #{tpu_custom_call.1} parent=1 // loop_pre_header
      _
    $region3: #{tpu_custom_call.1} parent=1 // loop_header
      %s19 = sphi 0, %s23
      %p20 = scmp.ge.s32.totalorder %s19, 4
      %s29 = sphi 0, %s31
      %s32 = sphi 0, %s29
      %s33 = sphi 0, %s32
      %s49 = sphi 0, %s33
      %s55 = sphi 0, %s57
      %s58 = sphi 0, %s55
      %s59 = sphi 0, %s58
      %s75 = sphi 0, %s59
      %s79 = sphi 0, %s79
      %s81 = sphi 0, %s79
      %s82 = sphi 0, %s81
      %s96 = sphi 0, %s82
      %s100 = sphi 0, %s100
      %s102 = sphi 0, %s100
      %s103 = sphi 0, %s102
      %s117 = sphi 0, %s103
      %s121 = sphi 0, %s121
      %s123 = sphi 0, %s121
      %s124 = sphi 0, %s123
      %s138 = sphi 0, %s124
      %s142 = sphi 0, %s142
      %s144 = sphi 0, %s142
      %s145 = sphi 0, %s144
      %s159 = sphi 0, %s145
      %s163 = sphi 0, %s163
      %s165 = sphi 0, %s163
      %s166 = sphi 0, %s165
      %s180 = sphi 0, %s166
      %s184 = sphi 0, %s184
      %s186 = sphi 0, %s184
      %s187 = sphi 0, %s186
      %s201 = sphi 0, %s187
      %s207 = sphi 0, %s209
      %s210 = sphi 0, %s207
      %s211 = sphi 0, %s210
      %s227 = sphi 0, %s211
    $region4: #{tpu_custom_call.1} parent=1 // loop_header_branch
      %22 = sbr.rel (%p20) target = $region8
    $region5: #{tpu_custom_call.1} parent=1 // loop_body
      %s24 = ssub.s32 %s19, 1
      %s25 = ssub.s32 %s19, 2
      %s26 = sadd.s32 %s19, 1
      %s27 = ssub.s32 %s19, %s26
      %p28 = scmp.eq.s32.totalorder %s27, 0
      %s30 = sadd.s32 %s29, 1
      %s31 = scalar_select %p28, %s29, %s30
      %p34 = pneg %p28
      %p35 = scmp.eq.s32.totalorder %s19, 1
      %p36 = por %p34, %p35
      %p37 = scmp.ne.s32.totalorder %s29, %s32
      %p38 = scmp.eq.s32.totalorder %s19, 0
      %p39 = por %p37, %p38
      %p40 = scmp.ne.s32.totalorder %s29, %s32
      %p41 = scmp.eq.s32.totalorder %s24, 1
      %p42 = por %p40, %p41
      %p43 = scmp.ne.s32.totalorder %s32, %s33
      %p44 = scmp.eq.s32.totalorder %s24, 0
      %p45 = por %p43, %p44
      %p46 = scmp.ne.s32.totalorder %s32, %s33
      %p47 = scmp.eq.s32.totalorder %s25, 1
      %p48 = por %p46, %p47
      %p50 = scmp.ne.s32.totalorder %s33, %s49
      %p51 = scmp.eq.s32.totalorder %s25, 0
      %p52 = por %p50, %p51
      %s53 = ssub.s32 %s19, %s26
      %p54 = scmp.eq.s32.totalorder %s53, 0
      %s56 = sadd.s32 %s55, 1
      %s57 = scalar_select %p54, %s55, %s56
      %p60 = pneg %p54
      %p61 = scmp.eq.s32.totalorder %s19, 1
      %p62 = por %p60, %p61
      %p63 = scmp.ne.s32.totalorder %s55, %s58
      %p64 = scmp.eq.s32.totalorder %s19, 0
      %p65 = por %p63, %p64
      %p66 = scmp.ne.s32.totalorder %s55, %s58
      %p67 = scmp.eq.s32.totalorder %s24, 1
      %p68 = por %p66, %p67
      %p69 = scmp.ne.s32.totalorder %s58, %s59
      %p70 = scmp.eq.s32.totalorder %s24, 0
      %p71 = por %p69, %p70
      %p72 = scmp.ne.s32.totalorder %s58, %s59
      %p73 = scmp.eq.s32.totalorder %s25, 1
      %p74 = por %p72, %p73
      %p76 = scmp.ne.s32.totalorder %s59, %s75
      %p77 = scmp.eq.s32.totalorder %s25, 0
      %p78 = por %p76, %p77
      %s80 = sadd.s32 %s79, 1
      %p83 = scmp.eq.s32.totalorder %s19, 1
      %p84 = scmp.ne.s32.totalorder %s79, %s81
      %p85 = scmp.eq.s32.totalorder %s19, 0
      %p86 = por %p84, %p85
      %p87 = scmp.ne.s32.totalorder %s79, %s81
      %p88 = scmp.eq.s32.totalorder %s24, 1
      %p89 = por %p87, %p88
      %p90 = scmp.ne.s32.totalorder %s81, %s82
      %p91 = scmp.eq.s32.totalorder %s24, 0
      %p92 = por %p90, %p91
      %p93 = scmp.ne.s32.totalorder %s81, %s82
      %p94 = scmp.eq.s32.totalorder %s25, 1
      %p95 = por %p93, %p94
      %p97 = scmp.ne.s32.totalorder %s82, %s96
      %p98 = scmp.eq.s32.totalorder %s25, 0
      %p99 = por %p97, %p98
      %s101 = sadd.s32 %s100, 1
      %p104 = scmp.eq.s32.totalorder %s19, 1
      %p105 = scmp.ne.s32.totalorder %s100, %s102
      %p106 = scmp.eq.s32.totalorder %s19, 0
      %p107 = por %p105, %p106
      %p108 = scmp.ne.s32.totalorder %s100, %s102
      %p109 = scmp.eq.s32.totalorder %s24, 1
      %p110 = por %p108, %p109
      %p111 = scmp.ne.s32.totalorder %s102, %s103
      %p112 = scmp.eq.s32.totalorder %s24, 0
      %p113 = por %p111, %p112
      %p114 = scmp.ne.s32.totalorder %s102, %s103
      %p115 = scmp.eq.s32.totalorder %s25, 1
      %p116 = por %p114, %p115
      %p118 = scmp.ne.s32.totalorder %s103, %s117
      %p119 = scmp.eq.s32.totalorder %s25, 0
      %p120 = por %p118, %p119
      %s122 = sadd.s32 %s121, 1
      %p125 = scmp.eq.s32.totalorder %s19, 1
      %p126 = scmp.ne.s32.totalorder %s121, %s123
      %p127 = scmp.eq.s32.totalorder %s19, 0
      %p128 = por %p126, %p127
      %p129 = scmp.ne.s32.totalorder %s121, %s123
      %p130 = scmp.eq.s32.totalorder %s24, 1
      %p131 = por %p129, %p130
      %p132 = scmp.ne.s32.totalorder %s123, %s124
      %p133 = scmp.eq.s32.totalorder %s24, 0
      %p134 = por %p132, %p133
      %p135 = scmp.ne.s32.totalorder %s123, %s124
      %p136 = scmp.eq.s32.totalorder %s25, 1
      %p137 = por %p135, %p136
      %p139 = scmp.ne.s32.totalorder %s124, %s138
      %p140 = scmp.eq.s32.totalorder %s25, 0
      %p141 = por %p139, %p140
      %s143 = sadd.s32 %s142, 1
      %p146 = scmp.eq.s32.totalorder %s19, 1
      %p147 = scmp.ne.s32.totalorder %s142, %s144
      %p148 = scmp.eq.s32.totalorder %s19, 0
      %p149 = por %p147, %p148
      %p150 = scmp.ne.s32.totalorder %s142, %s144
      %p151 = scmp.eq.s32.totalorder %s24, 1
      %p152 = por %p150, %p151
      %p153 = scmp.ne.s32.totalorder %s144, %s145
      %p154 = scmp.eq.s32.totalorder %s24, 0
      %p155 = por %p153, %p154
      %p156 = scmp.ne.s32.totalorder %s144, %s145
      %p157 = scmp.eq.s32.totalorder %s25, 1
      %p158 = por %p156, %p157
      %p160 = scmp.ne.s32.totalorder %s145, %s159
      %p161 = scmp.eq.s32.totalorder %s25, 0
      %p162 = por %p160, %p161
      %s164 = sadd.s32 %s163, 1
      %p167 = scmp.eq.s32.totalorder %s19, 1
      %p168 = scmp.ne.s32.totalorder %s163, %s165
      %p169 = scmp.eq.s32.totalorder %s19, 0
      %p170 = por %p168, %p169
      %p171 = scmp.ne.s32.totalorder %s163, %s165
      %p172 = scmp.eq.s32.totalorder %s24, 1
      %p173 = por %p171, %p172
      %p174 = scmp.ne.s32.totalorder %s165, %s166
      %p175 = scmp.eq.s32.totalorder %s24, 0
      %p176 = por %p174, %p175
      %p177 = scmp.ne.s32.totalorder %s165, %s166
      %p178 = scmp.eq.s32.totalorder %s25, 1
      %p179 = por %p177, %p178
      %p181 = scmp.ne.s32.totalorder %s166, %s180
      %p182 = scmp.eq.s32.totalorder %s25, 0
      %p183 = por %p181, %p182
      %s185 = sadd.s32 %s184, 1
      %p188 = scmp.eq.s32.totalorder %s19, 1
      %p189 = scmp.ne.s32.totalorder %s184, %s186
      %p190 = scmp.eq.s32.totalorder %s19, 0
      %p191 = por %p189, %p190
      %p192 = scmp.ne.s32.totalorder %s184, %s186
      %p193 = scmp.eq.s32.totalorder %s24, 1
      %p194 = por %p192, %p193
      %p195 = scmp.ne.s32.totalorder %s186, %s187
      %p196 = scmp.eq.s32.totalorder %s24, 0
      %p197 = por %p195, %p196
      %p198 = scmp.ne.s32.totalorder %s186, %s187
      %p199 = scmp.eq.s32.totalorder %s25, 1
      %p200 = por %p198, %p199
      %p202 = scmp.ne.s32.totalorder %s187, %s201
      %p203 = scmp.eq.s32.totalorder %s25, 0
      %p204 = por %p202, %p203
      %s205 = ssub.s32 %s19, %s26
      %p206 = scmp.eq.s32.totalorder %s205, 0
      %s208 = sadd.s32 %s207, 1
      %s209 = scalar_select %p206, %s207, %s208
      %p212 = pneg %p206
      %p213 = scmp.eq.s32.totalorder %s19, 1
      %p214 = por %p212, %p213
      %p215 = scmp.ne.s32.totalorder %s207, %s210
      %p216 = scmp.eq.s32.totalorder %s19, 0
      %p217 = por %p215, %p216
      %p218 = scmp.ne.s32.totalorder %s207, %s210
      %p219 = scmp.eq.s32.totalorder %s24, 1
      %p220 = por %p218, %p219
      %p221 = scmp.ne.s32.totalorder %s210, %s211
      %p222 = scmp.eq.s32.totalorder %s24, 0
      %p223 = por %p221, %p222
      %p224 = scmp.ne.s32.totalorder %s210, %s211
      %p225 = scmp.eq.s32.totalorder %s25, 1
      %p226 = por %p224, %p225
      %p228 = scmp.ne.s32.totalorder %s211, %s227
      %p229 = scmp.eq.s32.totalorder %s25, 0
      %p230 = por %p228, %p229
      %p231 = scmp.le.s32.totalorder 1, %s19
      %p232 = scmp.lt.s32.totalorder %s19, 3
      %p233 = pnand %p231, %p232
      %p234 = pneg %p233
      // Predicated region
      $region9: #{tpu_custom_call.1} parent=5 // pred_check
        _
      $region10: #{tpu_custom_call.1} parent=5 // pred_check_branch
        %236 = sbr.rel (%p233) target = $region12
      $region11: #{tpu_custom_call.1} parent=5 // pred_region
        %s237 = ssub.s32 %s19, 1
        // Predicated region
        $region13: #{tpu_custom_call.1} parent=11 // pred_check
          %p238 = pneg %p92
        $region14: #{tpu_custom_call.1} parent=11 // pred_check_branch
          %240 = sbr.rel (%p238) target = $region16
        $region15: #{tpu_custom_call.1} parent=11 // pred_region
          %242 = vsyncadd [#allocation3], 0
          %s243 = sshll.u32 %s2, 4
          %s244 = int_to_ptr.hbm [resolvable:$true] %s243
          %s245 = sshll.u32 [#allocation2], 4
          %s246 = int_to_ptr.vmem [resolvable:$true] %s245
          %251 = dma.hbm_to_vmem [thread:$0]  %s244, 3072, %s246, [#allocation3], 64, 64, 4
        $region16: #{tpu_custom_call.1} parent=11 // pred_fallthru
          _
        // Predicated region
        $region17: #{tpu_custom_call.1} parent=11 // pred_check
          %p252 = pneg %p113
        $region18: #{tpu_custom_call.1} parent=11 // pred_check_branch
          %254 = sbr.rel (%p252) target = $region20
        $region19: #{tpu_custom_call.1} parent=11 // pred_region
          _
        $region20: #{tpu_custom_call.1} parent=11 // pred_fallthru
          _
        // Predicated region
        $region21: #{tpu_custom_call.1} parent=11 // pred_check
          %p255 = pneg %p134
        $region22: #{tpu_custom_call.1} parent=11 // pred_check_branch
          %257 = sbr.rel (%p255) target = $region24
        $region23: #{tpu_custom_call.1} parent=11 // pred_region
          %259 = vsyncadd [#allocation6], 0
          %s260 = sshll.u32 %s4, 4
          %s261 = int_to_ptr.hbm [resolvable:$true] %s260
          %s262 = sshll.u32 [#allocation5], 4
          %s263 = int_to_ptr.vmem [resolvable:$true] %s262
          %268 = dma.hbm_to_vmem [thread:$0]  %s261, 256, %s263, [#allocation6], 64, 64, 4
        $region24: #{tpu_custom_call.1} parent=11 // pred_fallthru
          _
        // Predicated region
        $region25: #{tpu_custom_call.1} parent=11 // pred_check
          %p269 = pneg %p155
        $region26: #{tpu_custom_call.1} parent=11 // pred_check_branch
          %271 = sbr.rel (%p269) target = $region28
        $region27: #{tpu_custom_call.1} parent=11 // pred_region
          _
        $region28: #{tpu_custom_call.1} parent=11 // pred_fallthru
          _
        // Predicated region
        $region29: #{tpu_custom_call.1} parent=11 // pred_check
          %p272 = pneg %p176
        $region30: #{tpu_custom_call.1} parent=11 // pred_check_branch
          %274 = sbr.rel (%p272) target = $region32
        $region31: #{tpu_custom_call.1} parent=11 // pred_region
          %276 = vsyncadd [#allocation6], 0
          %s278 = sshll.u32 %s6, 4
          %s279 = int_to_ptr.hbm [resolvable:$true] %s278
          %s280 = sshll.u32 [#allocation7], 4
          %s281 = int_to_ptr.vmem [resolvable:$true] %s280
          %283 = dma.hbm_to_vmem [thread:$0]  %s279, 128, %s281, [#allocation6]
        $region32: #{tpu_custom_call.1} parent=11 // pred_fallthru
          _
        // Predicated region
        $region33: #{tpu_custom_call.1} parent=11 // pred_check
          %p284 = pneg %p197
        $region34: #{tpu_custom_call.1} parent=11 // pred_check_branch
          %286 = sbr.rel (%p284) target = $region36
        $region35: #{tpu_custom_call.1} parent=11 // pred_region
          _
        $region36: #{tpu_custom_call.1} parent=11 // pred_fallthru
          _
      $region12: #{tpu_custom_call.1} parent=5 // pred_fallthru
        _
      %p287 = scmp.lt.s32.totalorder %s19, 2
      // Predicated region
      $region37: #{tpu_custom_call.1} parent=5 // pred_check
        %p288 = pneg %p287
      $region38: #{tpu_custom_call.1} parent=5 // pred_check_branch
        %290 = sbr.rel (%p288) target = $region40
      $region39: #{tpu_custom_call.1} parent=5 // pred_region
        // Predicated region
        $region41: #{tpu_custom_call.1} parent=39 // pred_check
          %p291 = pneg %p39
        $region42: #{tpu_custom_call.1} parent=39 // pred_check_branch
          %293 = sbr.rel (%p291) target = $region44
        $region43: #{tpu_custom_call.1} parent=39 // pred_region
          %p294 = scmp.lt.s32.totalorder %s19, 1
          %s295 = scalar_select %p294, %s19, 1
          %s296 = smul.addr %s295, 8
          %s297 = scalar_lea.vmem %s0, %s296
        $region44: #{tpu_custom_call.1} parent=39 // pred_fallthru
          _
        // Predicated region
        $region45: #{tpu_custom_call.1} parent=39 // pred_check
          %p298 = pneg %p65
        $region46: #{tpu_custom_call.1} parent=39 // pred_check_branch
          %300 = sbr.rel (%p298) target = $region48
        $region47: #{tpu_custom_call.1} parent=39 // pred_region
          %p301 = scmp.lt.s32.totalorder %s19, 1
          %s302 = scalar_select %p301, %s19, 1
          %s303 = scalar_lea.vmem %s1, %s302
        $region48: #{tpu_custom_call.1} parent=39 // pred_fallthru
          _
      $region40: #{tpu_custom_call.1} parent=5 // pred_fallthru
        _
      %p304 = scmp.le.s32.totalorder 1, %s19
      %p305 = scmp.lt.s32.totalorder %s19, 3
      %p306 = pnand %p304, %p305
      %p307 = pneg %p306
      // Predicated region
      $region49: #{tpu_custom_call.1} parent=5 // pred_check
        _
      $region50: #{tpu_custom_call.1} parent=5 // pred_check_branch
        %309 = sbr.rel (%p306) target = $region52
      $region51: #{tpu_custom_call.1} parent=5 // pred_region
        %s310 = ssub.s32 %s19, 1
        // Predicated region
        $region53: #{tpu_custom_call.1} parent=51 // pred_check
          %p311 = pneg %p92
        $region54: #{tpu_custom_call.1} parent=51 // pred_check_branch
          %313 = sbr.rel (%p311) target = $region56
        $region55: #{tpu_custom_call.1} parent=51 // pred_region
          %315 = dma.done [#allocation3], 3072
        $region56: #{tpu_custom_call.1} parent=51 // pred_fallthru
          _
        // Predicated region
        $region57: #{tpu_custom_call.1} parent=51 // pred_check
          %p316 = pneg %p134
        $region58: #{tpu_custom_call.1} parent=51 // pred_check_branch
          %318 = sbr.rel (%p316) target = $region60
        $region59: #{tpu_custom_call.1} parent=51 // pred_region
          %320 = dma.done [#allocation6], 256
        $region60: #{tpu_custom_call.1} parent=51 // pred_fallthru
          _
        // Predicated region
        $region61: #{tpu_custom_call.1} parent=51 // pred_check
          %p321 = pneg %p176
        $region62: #{tpu_custom_call.1} parent=51 // pred_check_branch
          %323 = sbr.rel (%p321) target = $region64
        $region63: #{tpu_custom_call.1} parent=51 // pred_region
          %325 = dma.done [#allocation6], 128
        $region64: #{tpu_custom_call.1} parent=51 // pred_fallthru
          _
        %p326 = scmp.lt.s32.totalorder %s24, 1
        %s327 = scalar_select %p326, %s24, 1
        %s328 = smul.addr %s327, 8
        %s329 = scalar_lea.vmem %s0, %s328
        %p330 = pneg %p45
        %p331 = pneg %p42
        %p332 = scmp.lt.s32.totalorder %s24, 1
        %s333 = scalar_select %p332, %s24, 1
        %s334 = scalar_lea.vmem %s1, %s333
        %p335 = pneg %p71
        %p336 = pneg %p68
        %p337 = pneg %p92
        %p338 = pneg %p89
        %p339 = pneg %p113
        %p340 = pneg %p110
        %p341 = pneg %p134
        %p342 = pneg %p131
        %p343 = pneg %p155
        %p344 = pneg %p152
        %p345 = pneg %p176
        %p346 = pneg %p173
        %p347 = pneg %p197
        %p348 = pneg %p194
        %p349 = pneg %p223
        %p350 = pneg %p220
        %s351 = sand.u32 %s210, 1
        %s352 = scalar_lea.sflag [#allocation4], %s351
        %s353 = sand.u32 %s210, 1
        %s354 = smul.addr %s353, 8
        %s355 = scalar_lea.vmem [#allocation8], %s354
        %p356 = scmp.lt.s32.totalorder %s24, 1
        %s357 = scalar_select %p356, %s24, 1
        %s358 = smul.addr %s357, 8
        %s359 = scalar_lea.vmem %s0, %s358
        %p360 = scmp.lt.s32.totalorder %s24, 1
        %s361 = scalar_select %p360, %s24, 1
        %s362 = scalar_lea.vmem %s1, %s361
        %v364 = vld [vmem:[%s359] sm:$0xff]
        %v365 = vld [vmem:[%s362] sm:$0x1]
        %vm366 = vcmp.gt.f32.partialorder %v365, 0.0
        %v367 = vld [vmem:[#allocation7] sm:$0x3f]
        %v368 = vpack.c.bf16 %v364, %v364
        %v369 = vld [vmem:[#allocation2] sm:$0xf]
        %v370 = vld [vmem:[#allocation2 + $0x4] sm:$0xf]
        %v371 = vld [vmem:[#allocation2 + $0x8] sm:$0xf]
        %v372 = vld [vmem:[#allocation2 + $0xc] sm:$0xf]
        %v373 = vld [vmem:[#allocation2 + $0x10] sm:$0xf]
        %v374 = vld [vmem:[#allocation2 + $0x14] sm:$0xf]
        %v375 = vld [vmem:[#allocation2 + $0x18] sm:$0xf]
        %v376 = vld [vmem:[#allocation2 + $0x1c] sm:$0xf]
        %v377 = vld [vmem:[#allocation2 + $0x20] sm:$0xf]
        %v378 = vld [vmem:[#allocation2 + $0x24] sm:$0xf]
        %v379 = vld [vmem:[#allocation2 + $0x28] sm:$0xf]
        %v380 = vld [vmem:[#allocation2 + $0x2c] sm:$0xf]
        %v381 = vld [vmem:[#allocation2 + $0x30] sm:$0xf]
        %v382 = vld [vmem:[#allocation2 + $0x34] sm:$0xf]
        %v383 = vld [vmem:[#allocation2 + $0x38] sm:$0xf]
        %v384 = vld [vmem:[#allocation2 + $0x3c] sm:$0xf]
        %v385 = vld [vmem:[#allocation2 + $0x40] sm:$0xf]
        %v386 = vld [vmem:[#allocation2 + $0x44] sm:$0xf]
        %v387 = vld [vmem:[#allocation2 + $0x48] sm:$0xf]
        %v388 = vld [vmem:[#allocation2 + $0x4c] sm:$0xf]
        %v389 = vld [vmem:[#allocation2 + $0x50] sm:$0xf]
        %v390 = vld [vmem:[#allocation2 + $0x54] sm:$0xf]
        %v391 = vld [vmem:[#allocation2 + $0x58] sm:$0xf]
        %v392 = vld [vmem:[#allocation2 + $0x5c] sm:$0xf]
        %v393 = vld [vmem:[#allocation2 + $0x60] sm:$0xf]
        %v394 = vld [vmem:[#allocation2 + $0x64] sm:$0xf]
        %v395 = vld [vmem:[#allocation2 + $0x68] sm:$0xf]
        %v396 = vld [vmem:[#allocation2 + $0x6c] sm:$0xf]
        %v397 = vld [vmem:[#allocation2 + $0x70] sm:$0xf]
        %v398 = vld [vmem:[#allocation2 + $0x74] sm:$0xf]
        %v399 = vld [vmem:[#allocation2 + $0x78] sm:$0xf]
        %v400 = vld [vmem:[#allocation2 + $0x7c] sm:$0xf]
        %v401 = vld [vmem:[#allocation2 + $0x80] sm:$0xf]
        %v402 = vld [vmem:[#allocation2 + $0x84] sm:$0xf]
        %v403 = vld [vmem:[#allocation2 + $0x88] sm:$0xf]
        %v404 = vld [vmem:[#allocation2 + $0x8c] sm:$0xf]
        %v405 = vld [vmem:[#allocation2 + $0x90] sm:$0xf]
        %v406 = vld [vmem:[#allocation2 + $0x94] sm:$0xf]
        %v407 = vld [vmem:[#allocation2 + $0x98] sm:$0xf]
        %v408 = vld [vmem:[#allocation2 + $0x9c] sm:$0xf]
        %v409 = vld [vmem:[#allocation2 + $0xa0] sm:$0xf]
        %v410 = vld [vmem:[#allocation2 + $0xa4] sm:$0xf]
        %v411 = vld [vmem:[#allocation2 + $0xa8] sm:$0xf]
        %v412 = vld [vmem:[#allocation2 + $0xac] sm:$0xf]
        %v413 = vld [vmem:[#allocation2 + $0xb0] sm:$0xf]
        %v414 = vld [vmem:[#allocation2 + $0xb4] sm:$0xf]
        %v415 = vld [vmem:[#allocation2 + $0xb8] sm:$0xf]
        %v416 = vld [vmem:[#allocation2 + $0xbc] sm:$0xf]
        %v421 = vunpack.c.l.b16 %v369
        %v422 = vunpack.c.l.b16 %v370
        %v423 = vunpack.c.l.b16 %v371
        %v424 = vunpack.c.l.b16 %v372
        %v425 = vpack.c.b16 %v422, %v421
        %v426 = vpack.c.b16 %v424, %v423
        %vm429 = vcmask 261120
        %v431 = vsel %vm429, %v368, 0
        %433 = vmatpush.bf16.msra.mxu0 0
        %434 = vmatpush.bf16.msra.mxu0 0
        %435 = vmatpush.bf16.msra.mxu0 0
        %436 = vmatpush.bf16.msra.mxu0 0
        %437 = vmatpush.bf16.msra.mxu0 0
        %438 = vmatpush.bf16.msra.mxu0 0
        %439 = vmatpush.bf16.msra.mxu0 %v426
        %440 = vmatpush.bf16.msra.mxu0 %v425
        %441 = vmatmul.bf16.gmra.mxu0 %v431
        %v442 = vpop.f32.mrf.mxu0
        %v443 = vadd.f32 0.0, %v442
        %v444 = vpop.f32.mrf.mxu0
        %445 = vdwg.mxu0
        %v450 = vunpack.c.l.b16 %v373
        %v451 = vunpack.c.l.b16 %v374
        %v452 = vunpack.c.l.b16 %v375
        %v453 = vunpack.c.l.b16 %v376
        %v454 = vpack.c.b16 %v451, %v450
        %v455 = vpack.c.b16 %v453, %v452
        %458 = vmatpush.bf16.msra.mxu0 0
        %459 = vmatpush.bf16.msra.mxu0 0
        %460 = vmatpush.bf16.msra.mxu0 0
        %461 = vmatpush.bf16.msra.mxu0 0
        %462 = vmatpush.bf16.msra.mxu0 0
        %463 = vmatpush.bf16.msra.mxu0 0
        %464 = vmatpush.bf16.msra.mxu0 %v455
        %465 = vmatpush.bf16.msra.mxu0 %v454
        %466 = vmatmul.bf16.gmra.mxu0 %v431
        %v467 = vpop.f32.mrf.mxu0
        %v468 = vadd.f32 0.0, %v467
        %v469 = vpop.f32.mrf.mxu0
        %470 = vdwg.mxu0
        %v475 = vunpack.c.l.b16 %v377
        %v476 = vunpack.c.l.b16 %v378
        %v477 = vunpack.c.l.b16 %v379
        %v478 = vunpack.c.l.b16 %v380
        %v479 = vpack.c.b16 %v476, %v475
        %v480 = vpack.c.b16 %v478, %v477
        %483 = vmatpush.bf16.msra.mxu0 0
        %484 = vmatpush.bf16.msra.mxu0 0
        %485 = vmatpush.bf16.msra.mxu0 0
        %486 = vmatpush.bf16.msra.mxu0 0
        %487 = vmatpush.bf16.msra.mxu0 0
        %488 = vmatpush.bf16.msra.mxu0 0
        %489 = vmatpush.bf16.msra.mxu0 %v480
        %490 = vmatpush.bf16.msra.mxu0 %v479
        %491 = vmatmul.bf16.gmra.mxu0 %v431
        %v492 = vpop.f32.mrf.mxu0
        %v493 = vadd.f32 0.0, %v492
        %v494 = vpop.f32.mrf.mxu0
        %495 = vdwg.mxu0
        %v500 = vunpack.c.l.b16 %v381
        %v501 = vunpack.c.l.b16 %v382
        %v502 = vunpack.c.l.b16 %v383
        %v503 = vunpack.c.l.b16 %v384
        %v504 = vpack.c.b16 %v501, %v500
        %v505 = vpack.c.b16 %v503, %v502
        %508 = vmatpush.bf16.msra.mxu0 0
        %509 = vmatpush.bf16.msra.mxu0 0
        %510 = vmatpush.bf16.msra.mxu0 0
        %511 = vmatpush.bf16.msra.mxu0 0
        %512 = vmatpush.bf16.msra.mxu0 0
        %513 = vmatpush.bf16.msra.mxu0 0
        %514 = vmatpush.bf16.msra.mxu0 %v505
        %515 = vmatpush.bf16.msra.mxu0 %v504
        %516 = vmatmul.bf16.gmra.mxu0 %v431
        %v517 = vpop.f32.mrf.mxu0
        %v518 = vadd.f32 0.0, %v517
        %v519 = vpop.f32.mrf.mxu0
        %520 = vdwg.mxu0
        %v525 = vunpack.c.l.b16 %v385
        %v526 = vunpack.c.l.b16 %v386
        %v527 = vunpack.c.l.b16 %v387
        %v528 = vunpack.c.l.b16 %v388
        %v529 = vpack.c.b16 %v526, %v525
        %v530 = vpack.c.b16 %v528, %v527
        %533 = vmatpush.bf16.msra.mxu0 0
        %534 = vmatpush.bf16.msra.mxu0 0
        %535 = vmatpush.bf16.msra.mxu0 0
        %536 = vmatpush.bf16.msra.mxu0 0
        %537 = vmatpush.bf16.msra.mxu0 0
        %538 = vmatpush.bf16.msra.mxu0 0
        %539 = vmatpush.bf16.msra.mxu0 %v530
        %540 = vmatpush.bf16.msra.mxu0 %v529
        %541 = vmatmul.bf16.gmra.mxu0 %v431
        %v542 = vpop.f32.mrf.mxu0
        %v543 = vadd.f32 0.0, %v542
        %v544 = vpop.f32.mrf.mxu0
        %545 = vdwg.mxu0
        %v550 = vunpack.c.l.b16 %v389
        %v551 = vunpack.c.l.b16 %v390
        %v552 = vunpack.c.l.b16 %v391
        %v553 = vunpack.c.l.b16 %v392
        %v554 = vpack.c.b16 %v551, %v550
        %v555 = vpack.c.b16 %v553, %v552
        %558 = vmatpush.bf16.msra.mxu0 0
        %559 = vmatpush.bf16.msra.mxu0 0
        %560 = vmatpush.bf16.msra.mxu0 0
        %561 = vmatpush.bf16.msra.mxu0 0
        %562 = vmatpush.bf16.msra.mxu0 0
        %563 = vmatpush.bf16.msra.mxu0 0
        %564 = vmatpush.bf16.msra.mxu0 %v555
        %565 = vmatpush.bf16.msra.mxu0 %v554
        %566 = vmatmul.bf16.gmra.mxu0 %v431
        %v567 = vpop.f32.mrf.mxu0
        %v568 = vadd.f32 0.0, %v567
        %v569 = vpop.f32.mrf.mxu0
        %570 = vdwg.mxu0
        %v575 = vunpack.c.l.b16 %v393
        %v576 = vunpack.c.l.b16 %v394
        %v577 = vunpack.c.l.b16 %v395
        %v578 = vunpack.c.l.b16 %v396
        %v579 = vpack.c.b16 %v576, %v575
        %v580 = vpack.c.b16 %v578, %v577
        %583 = vmatpush.bf16.msra.mxu0 0
        %584 = vmatpush.bf16.msra.mxu0 0
        %585 = vmatpush.bf16.msra.mxu0 0
        %586 = vmatpush.bf16.msra.mxu0 0
        %587 = vmatpush.bf16.msra.mxu0 0
        %588 = vmatpush.bf16.msra.mxu0 0
        %589 = vmatpush.bf16.msra.mxu0 %v580
        %590 = vmatpush.bf16.msra.mxu0 %v579
        %591 = vmatmul.bf16.gmra.mxu0 %v431
        %v592 = vpop.f32.mrf.mxu0
        %v593 = vadd.f32 0.0, %v592
        %v594 = vpop.f32.mrf.mxu0
        %595 = vdwg.mxu0
        %v600 = vunpack.c.l.b16 %v397
        %v601 = vunpack.c.l.b16 %v398
        %v602 = vunpack.c.l.b16 %v399
        %v603 = vunpack.c.l.b16 %v400
        %v604 = vpack.c.b16 %v601, %v600
        %v605 = vpack.c.b16 %v603, %v602
        %608 = vmatpush.bf16.msra.mxu0 0
        %609 = vmatpush.bf16.msra.mxu0 0
        %610 = vmatpush.bf16.msra.mxu0 0
        %611 = vmatpush.bf16.msra.mxu0 0
        %612 = vmatpush.bf16.msra.mxu0 0
        %613 = vmatpush.bf16.msra.mxu0 0
        %614 = vmatpush.bf16.msra.mxu0 %v605
        %615 = vmatpush.bf16.msra.mxu0 %v604
        %616 = vmatmul.bf16.gmra.mxu0 %v431
        %v617 = vpop.f32.mrf.mxu0
        %v618 = vadd.f32 0.0, %v617
        %v619 = vpop.f32.mrf.mxu0
        %620 = vdwg.mxu0
        %v625 = vunpack.c.l.b16 %v401
        %v626 = vunpack.c.l.b16 %v402
        %v627 = vunpack.c.l.b16 %v403
        %v628 = vunpack.c.l.b16 %v404
        %v629 = vpack.c.b16 %v626, %v625
        %v630 = vpack.c.b16 %v628, %v627
        %633 = vmatpush.bf16.msra.mxu0 0
        %634 = vmatpush.bf16.msra.mxu0 0
        %635 = vmatpush.bf16.msra.mxu0 0
        %636 = vmatpush.bf16.msra.mxu0 0
        %637 = vmatpush.bf16.msra.mxu0 0
        %638 = vmatpush.bf16.msra.mxu0 0
        %639 = vmatpush.bf16.msra.mxu0 %v630
        %640 = vmatpush.bf16.msra.mxu0 %v629
        %641 = vmatmul.bf16.gmra.mxu0 %v431
        %v642 = vpop.f32.mrf.mxu0
        %v643 = vadd.f32 0.0, %v642
        %v644 = vpop.f32.mrf.mxu0
        %645 = vdwg.mxu0
        %v650 = vunpack.c.l.b16 %v405
        %v651 = vunpack.c.l.b16 %v406
        %v652 = vunpack.c.l.b16 %v407
        %v653 = vunpack.c.l.b16 %v408
        %v654 = vpack.c.b16 %v651, %v650
        %v655 = vpack.c.b16 %v653, %v652
        %658 = vmatpush.bf16.msra.mxu0 0
        %659 = vmatpush.bf16.msra.mxu0 0
        %660 = vmatpush.bf16.msra.mxu0 0
        %661 = vmatpush.bf16.msra.mxu0 0
        %662 = vmatpush.bf16.msra.mxu0 0
        %663 = vmatpush.bf16.msra.mxu0 0
        %664 = vmatpush.bf16.msra.mxu0 %v655
        %665 = vmatpush.bf16.msra.mxu0 %v654
        %666 = vmatmul.bf16.gmra.mxu0 %v431
        %v667 = vpop.f32.mrf.mxu0
        %v668 = vadd.f32 0.0, %v667
        %v669 = vpop.f32.mrf.mxu0
        %670 = vdwg.mxu0
        %v675 = vunpack.c.l.b16 %v409
        %v676 = vunpack.c.l.b16 %v410
        %v677 = vunpack.c.l.b16 %v411
        %v678 = vunpack.c.l.b16 %v412
        %v679 = vpack.c.b16 %v676, %v675
        %v680 = vpack.c.b16 %v678, %v677
        %683 = vmatpush.bf16.msra.mxu0 0
        %684 = vmatpush.bf16.msra.mxu0 0
        %685 = vmatpush.bf16.msra.mxu0 0
        %686 = vmatpush.bf16.msra.mxu0 0
        %687 = vmatpush.bf16.msra.mxu0 0
        %688 = vmatpush.bf16.msra.mxu0 0
        %689 = vmatpush.bf16.msra.mxu0 %v680
        %690 = vmatpush.bf16.msra.mxu0 %v679
        %691 = vmatmul.bf16.gmra.mxu0 %v431
        %v692 = vpop.f32.mrf.mxu0
        %v693 = vadd.f32 0.0, %v692
        %v694 = vpop.f32.mrf.mxu0
        %695 = vdwg.mxu0
        %v700 = vunpack.c.l.b16 %v413
        %v701 = vunpack.c.l.b16 %v414
        %v702 = vunpack.c.l.b16 %v415
        %v703 = vunpack.c.l.b16 %v416
        %v704 = vpack.c.b16 %v701, %v700
        %v705 = vpack.c.b16 %v703, %v702
        %708 = vmatpush.bf16.msra.mxu0 0
        %709 = vmatpush.bf16.msra.mxu0 0
        %710 = vmatpush.bf16.msra.mxu0 0
        %711 = vmatpush.bf16.msra.mxu0 0
        %712 = vmatpush.bf16.msra.mxu0 0
        %713 = vmatpush.bf16.msra.mxu0 0
        %714 = vmatpush.bf16.msra.mxu0 %v705
        %715 = vmatpush.bf16.msra.mxu0 %v704
        %716 = vmatmul.bf16.gmra.mxu0 %v431
        %v717 = vpop.f32.mrf.mxu0
        %v718 = vadd.f32 0.0, %v717
        %v719 = vpop.f32.mrf.mxu0
        %720 = vdwg.mxu0
        %v721 = vpack.c.bf16 %v443, %v443
        %v722 = vpack.c.bf16 %v468, %v468
        %v723 = vpack.c.bf16 %v493, %v493
        %v724 = vpack.c.bf16 %v518, %v518
        %v725 = vpack.c.bf16 %v543, %v543
        %v726 = vpack.c.bf16 %v568, %v568
        %v727 = vpack.c.bf16 %v593, %v593
        %v728 = vpack.c.bf16 %v618, %v618
        %v729 = vpack.c.bf16 %v643, %v643
        %v730 = vpack.c.bf16 %v668, %v668
        %v731 = vpack.c.bf16 %v693, %v693
        %v732 = vpack.c.bf16 %v718, %v718
        %v734 = vsel %vm429, %v721, 0
        %v737 = vsel %vm429, %v725, 0
        %739 = vmatpush.bf16.xpose.msra.mxu0 0
        %740 = vmatpush.bf16.xpose.msra.mxu0 0
        %741 = vmatpush.bf16.xpose.msra.mxu0 0
        %742 = vmatpush.bf16.xpose.msra.mxu0 0
        %743 = vmatpush.bf16.xpose.msra.mxu0 0
        %744 = vmatpush.bf16.xpose.msra.mxu0 0
        %745 = vmatpush.bf16.xpose.msra.mxu0 0
        %746 = vmatpush.bf16.xpose.msra.mxu0 %v737
        %747 = vmatmul.bf16.gmra.mxu0 %v734
        %v748 = vpop.f32.mrf.mxu0
        %v749 = vadd.f32 0.0, %v748
        %v750 = vpop.f32.mrf.mxu0
        %751 = vdwg.mxu0
        %v753 = vsel %vm429, %v722, 0
        %v756 = vsel %vm429, %v726, 0
        %758 = vmatpush.bf16.xpose.msra.mxu0 0
        %759 = vmatpush.bf16.xpose.msra.mxu0 0
        %760 = vmatpush.bf16.xpose.msra.mxu0 0
        %761 = vmatpush.bf16.xpose.msra.mxu0 0
        %762 = vmatpush.bf16.xpose.msra.mxu0 0
        %763 = vmatpush.bf16.xpose.msra.mxu0 0
        %764 = vmatpush.bf16.xpose.msra.mxu0 0
        %765 = vmatpush.bf16.xpose.msra.mxu0 %v756
        %766 = vmatmul.bf16.gmra.mxu0 %v753
        %v767 = vpop.f32.mrf.mxu0
        %v768 = vadd.f32 0.0, %v767
        %v769 = vpop.f32.mrf.mxu0
        %770 = vdwg.mxu0
        %v772 = vsel %vm429, %v723, 0
        %v775 = vsel %vm429, %v727, 0
        %777 = vmatpush.bf16.xpose.msra.mxu0 0
        %778 = vmatpush.bf16.xpose.msra.mxu0 0
        %779 = vmatpush.bf16.xpose.msra.mxu0 0
        %780 = vmatpush.bf16.xpose.msra.mxu0 0
        %781 = vmatpush.bf16.xpose.msra.mxu0 0
        %782 = vmatpush.bf16.xpose.msra.mxu0 0
        %783 = vmatpush.bf16.xpose.msra.mxu0 0
        %784 = vmatpush.bf16.xpose.msra.mxu0 %v775
        %785 = vmatmul.bf16.gmra.mxu0 %v772
        %v786 = vpop.f32.mrf.mxu0
        %v787 = vadd.f32 0.0, %v786
        %v788 = vpop.f32.mrf.mxu0
        %789 = vdwg.mxu0
        %v791 = vsel %vm429, %v724, 0
        %v794 = vsel %vm429, %v728, 0
        %796 = vmatpush.bf16.xpose.msra.mxu0 0
        %797 = vmatpush.bf16.xpose.msra.mxu0 0
        %798 = vmatpush.bf16.xpose.msra.mxu0 0
        %799 = vmatpush.bf16.xpose.msra.mxu0 0
        %800 = vmatpush.bf16.xpose.msra.mxu0 0
        %801 = vmatpush.bf16.xpose.msra.mxu0 0
        %802 = vmatpush.bf16.xpose.msra.mxu0 0
        %803 = vmatpush.bf16.xpose.msra.mxu0 %v794
        %804 = vmatmul.bf16.gmra.mxu0 %v791
        %v805 = vpop.f32.mrf.mxu0
        %v806 = vadd.f32 0.0, %v805
        %v807 = vpop.f32.mrf.mxu0
        %808 = vdwg.mxu0
        %v809 = vsel %vm366, 1, 0
        %v810 = vperm.slane %v809, 0
        %vm811 = vcmp.eq.s32.totalorder %v810, 1
        %v812 = vsel %vm811, %v749, -1e+30
        %v813 = vsel %vm811, %v768, -1e+30
        %v814 = vsel %vm811, %v787, -1e+30
        %v815 = vsel %vm811, %v806, -1e+30
        %vm816 = vcmask 64512
        %v817 = vsel %vm816, %v812, -inf
        %818 = vmax.xlane.f32.xlu0 %v817
        %v819 = vpop.xlane.xlu0 %818
        %v820 = vsel %vm816, %v813, -inf
        %821 = vmax.xlane.f32.xlu0 %v820
        %v822 = vpop.xlane.xlu0 %821
        %v823 = vsel %vm816, %v814, -inf
        %824 = vmax.xlane.f32.xlu0 %v823
        %v825 = vpop.xlane.xlu0 %824
        %v826 = vsel %vm816, %v815, -inf
        %827 = vmax.xlane.f32.xlu0 %v826
        %v828 = vpop.xlane.xlu0 %827
        %v829 = vsub.f32 %v812, %v819
        %v830 = vsub.f32 %v813, %v822
        %v831 = vsub.f32 %v814, %v825
        %v832 = vsub.f32 %v815, %v828
        %v833 = vmul.f32 %v829, 1.442695
        %v834 = vpow.pop %v833
        %v835 = vmul.f32 %v830, 1.442695
        %v836 = vpow.pop %v835
        %v837 = vmul.f32 %v831, 1.442695
        %v838 = vpow.pop %v837
        %v839 = vmul.f32 %v832, 1.442695
        %v840 = vpow.pop %v839
        %v841 = vsel %vm816, %v834, 0.0
        %842 = vadd.xlane.f32.xlu0 %v841
        %v843 = vpop.xlane.xlu0 %842
        %v844 = vsel %vm816, %v836, 0.0
        %845 = vadd.xlane.f32.xlu0 %v844
        %v846 = vpop.xlane.xlu0 %845
        %v847 = vsel %vm816, %v838, 0.0
        %848 = vadd.xlane.f32.xlu0 %v847
        %v849 = vpop.xlane.xlu0 %848
        %v850 = vsel %vm816, %v840, 0.0
        %851 = vadd.xlane.f32.xlu0 %v850
        %v852 = vpop.xlane.xlu0 %851
        %v853 = vrcp.pop %v843
        %v854 = vrcp.pop %v846
        %v855 = vrcp.pop %v849
        %v856 = vrcp.pop %v852
        %v857 = vmul.f32 %v834, %v853
        %v858 = vmul.f32 %v836, %v854
        %v859 = vmul.f32 %v838, %v855
        %v860 = vmul.f32 %v840, %v856
        %v861 = vpack.c.bf16 %v857, %v857
        %v862 = vpack.c.bf16 %v858, %v858
        %v863 = vpack.c.bf16 %v859, %v859
        %v864 = vpack.c.bf16 %v860, %v860
        %v866 = vsel %vm816, %v861, 0
        %vm868 = vcmask 1043456
        %v870 = vsel %vm868, %v729, 0
        %872 = vmatpush.bf16.msra.mxu0 0
        %873 = vmatpush.bf16.msra.mxu0 0
        %874 = vmatpush.bf16.msra.mxu0 0
        %875 = vmatpush.bf16.msra.mxu0 0
        %876 = vmatpush.bf16.msra.mxu0 0
        %877 = vmatpush.bf16.msra.mxu0 0
        %878 = vmatpush.bf16.msra.mxu0 0
        %879 = vmatpush.bf16.msra.mxu0 %v870
        %880 = vmatmul.bf16.gmra.mxu0 %v866
        %v881 = vpop.f32.mrf.mxu0
        %v882 = vadd.f32 0.0, %v881
        %v883 = vpop.f32.mrf.mxu0
        %884 = vdwg.mxu0
        %v886 = vsel %vm816, %v862, 0
        %v889 = vsel %vm868, %v730, 0
        %891 = vmatpush.bf16.msra.mxu0 0
        %892 = vmatpush.bf16.msra.mxu0 0
        %893 = vmatpush.bf16.msra.mxu0 0
        %894 = vmatpush.bf16.msra.mxu0 0
        %895 = vmatpush.bf16.msra.mxu0 0
        %896 = vmatpush.bf16.msra.mxu0 0
        %897 = vmatpush.bf16.msra.mxu0 0
        %898 = vmatpush.bf16.msra.mxu0 %v889
        %899 = vmatmul.bf16.gmra.mxu0 %v886
        %v900 = vpop.f32.mrf.mxu0
        %v901 = vadd.f32 0.0, %v900
        %v902 = vpop.f32.mrf.mxu0
        %903 = vdwg.mxu0
        %v905 = vsel %vm816, %v863, 0
        %v908 = vsel %vm868, %v731, 0
        %910 = vmatpush.bf16.msra.mxu0 0
        %911 = vmatpush.bf16.msra.mxu0 0
        %912 = vmatpush.bf16.msra.mxu0 0
        %913 = vmatpush.bf16.msra.mxu0 0
        %914 = vmatpush.bf16.msra.mxu0 0
        %915 = vmatpush.bf16.msra.mxu0 0
        %916 = vmatpush.bf16.msra.mxu0 0
        %917 = vmatpush.bf16.msra.mxu0 %v908
        %918 = vmatmul.bf16.gmra.mxu0 %v905
        %v919 = vpop.f32.mrf.mxu0
        %v920 = vadd.f32 0.0, %v919
        %v921 = vpop.f32.mrf.mxu0
        %922 = vdwg.mxu0
        %v924 = vsel %vm816, %v864, 0
        %v927 = vsel %vm868, %v732, 0
        %929 = vmatpush.bf16.msra.mxu0 0
        %930 = vmatpush.bf16.msra.mxu0 0
        %931 = vmatpush.bf16.msra.mxu0 0
        %932 = vmatpush.bf16.msra.mxu0 0
        %933 = vmatpush.bf16.msra.mxu0 0
        %934 = vmatpush.bf16.msra.mxu0 0
        %935 = vmatpush.bf16.msra.mxu0 0
        %936 = vmatpush.bf16.msra.mxu0 %v927
        %937 = vmatmul.bf16.gmra.mxu0 %v924
        %v938 = vpop.f32.mrf.mxu0
        %v939 = vadd.f32 0.0, %v938
        %v940 = vpop.f32.mrf.mxu0
        %941 = vdwg.mxu0
        %v942 = vpack.c.bf16 %v882, %v882
        %v943 = vpack.c.bf16 %v901, %v901
        %v944 = vpack.c.bf16 %v920, %v920
        %v945 = vpack.c.bf16 %v939, %v939
        %v946 = vld [vmem:[%s3] sm:$0xf]
        %v947 = vld [vmem:[%s3 + $0x4] sm:$0xf]
        %v948 = vld [vmem:[%s3 + $0x8] sm:$0xf]
        %v949 = vld [vmem:[%s3 + $0xc] sm:$0xf]
        %v950 = vld [vmem:[%s3 + $0x10] sm:$0xf]
        %v951 = vld [vmem:[%s3 + $0x14] sm:$0xf]
        %v952 = vld [vmem:[%s3 + $0x18] sm:$0xf]
        %v953 = vld [vmem:[%s3 + $0x1c] sm:$0xf]
        %v954 = vld [vmem:[%s3 + $0x20] sm:$0xf]
        %v955 = vld [vmem:[%s3 + $0x24] sm:$0xf]
        %v956 = vld [vmem:[%s3 + $0x28] sm:$0xf]
        %v957 = vld [vmem:[%s3 + $0x2c] sm:$0xf]
        %v958 = vld [vmem:[%s3 + $0x30] sm:$0xf]
        %v959 = vld [vmem:[%s3 + $0x34] sm:$0xf]
        %v960 = vld [vmem:[%s3 + $0x38] sm:$0xf]
        %v961 = vld [vmem:[%s3 + $0x3c] sm:$0xf]
        %v966 = vunpack.c.l.b16 %v946
        %v967 = vunpack.c.l.b16 %v947
        %v968 = vunpack.c.l.b16 %v948
        %v969 = vunpack.c.l.b16 %v949
        %v970 = vpack.c.b16 %v967, %v966
        %v971 = vpack.c.b16 %v969, %v968
        %v975 = vsel %vm429, %v942, 0
        %977 = vmatpush.bf16.msra.mxu0 0
        %978 = vmatpush.bf16.msra.mxu0 0
        %979 = vmatpush.bf16.msra.mxu0 0
        %980 = vmatpush.bf16.msra.mxu0 0
        %981 = vmatpush.bf16.msra.mxu0 0
        %982 = vmatpush.bf16.msra.mxu0 0
        %983 = vmatpush.bf16.msra.mxu0 %v971
        %984 = vmatpush.bf16.msra.mxu0 %v970
        %985 = vmatmul.bf16.gmra.mxu0 %v975
        %v986 = vpop.f32.mrf.mxu0
        %v987 = vadd.f32 0.0, %v986
        %v988 = vpop.f32.mrf.mxu0
        %989 = vdwg.mxu0
        %v994 = vunpack.c.l.b16 %v950
        %v995 = vunpack.c.l.b16 %v951
        %v996 = vunpack.c.l.b16 %v952
        %v997 = vunpack.c.l.b16 %v953
        %v998 = vpack.c.b16 %v995, %v994
        %v999 = vpack.c.b16 %v997, %v996
        %v1003 = vsel %vm429, %v943, 0
        %1005 = vmatpush.bf16.msra.mxu0 0
        %1006 = vmatpush.bf16.msra.mxu0 0
        %1007 = vmatpush.bf16.msra.mxu0 0
        %1008 = vmatpush.bf16.msra.mxu0 0
        %1009 = vmatpush.bf16.msra.mxu0 0
        %1010 = vmatpush.bf16.msra.mxu0 0
        %1011 = vmatpush.bf16.msra.mxu0 %v999
        %1012 = vmatpush.bf16.msra.mxu0 %v998
        %1013 = vmatmul.bf16.gmra.mxu0 %v1003
        %v1014 = vpop.f32.mrf.mxu0
        %v1015 = vadd.f32 0.0, %v1014
        %v1016 = vpop.f32.mrf.mxu0
        %1017 = vdwg.mxu0
        %v1022 = vunpack.c.l.b16 %v954
        %v1023 = vunpack.c.l.b16 %v955
        %v1024 = vunpack.c.l.b16 %v956
        %v1025 = vunpack.c.l.b16 %v957
        %v1026 = vpack.c.b16 %v1023, %v1022
        %v1027 = vpack.c.b16 %v1025, %v1024
        %v1031 = vsel %vm429, %v944, 0
        %1033 = vmatpush.bf16.msra.mxu0 0
        %1034 = vmatpush.bf16.msra.mxu0 0
        %1035 = vmatpush.bf16.msra.mxu0 0
        %1036 = vmatpush.bf16.msra.mxu0 0
        %1037 = vmatpush.bf16.msra.mxu0 0
        %1038 = vmatpush.bf16.msra.mxu0 0
        %1039 = vmatpush.bf16.msra.mxu0 %v1027
        %1040 = vmatpush.bf16.msra.mxu0 %v1026
        %1041 = vmatmul.bf16.gmra.mxu0 %v1031
        %v1042 = vpop.f32.mrf.mxu0
        %v1043 = vadd.f32 0.0, %v1042
        %v1044 = vpop.f32.mrf.mxu0
        %1045 = vdwg.mxu0
        %v1050 = vunpack.c.l.b16 %v958
        %v1051 = vunpack.c.l.b16 %v959
        %v1052 = vunpack.c.l.b16 %v960
        %v1053 = vunpack.c.l.b16 %v961
        %v1054 = vpack.c.b16 %v1051, %v1050
        %v1055 = vpack.c.b16 %v1053, %v1052
        %v1059 = vsel %vm429, %v945, 0
        %1061 = vmatpush.bf16.msra.mxu0 0
        %1062 = vmatpush.bf16.msra.mxu0 0
        %1063 = vmatpush.bf16.msra.mxu0 0
        %1064 = vmatpush.bf16.msra.mxu0 0
        %1065 = vmatpush.bf16.msra.mxu0 0
        %1066 = vmatpush.bf16.msra.mxu0 0
        %1067 = vmatpush.bf16.msra.mxu0 %v1055
        %1068 = vmatpush.bf16.msra.mxu0 %v1054
        %1069 = vmatmul.bf16.gmra.mxu0 %v1059
        %v1070 = vpop.f32.mrf.mxu0
        %v1071 = vadd.f32 0.0, %v1070
        %v1072 = vpop.f32.mrf.mxu0
        %1073 = vdwg.mxu0
        %v1074 = vsel %vm429, %v987, 0.0
        %v1075 = vsel %vm429, %v1015, 0.0
        %v1076 = vadd.f32 %v1074, %v1075
        %v1077 = vsel %vm429, %v1043, 0.0
        %v1078 = vadd.f32 %v1076, %v1077
        %v1079 = vsel %vm429, %v1071, 0.0
        %v1080 = vadd.f32 %v1078, %v1079
        %v1081 = vperm.slane %v367, 0
        %v1082 = vadd.f32 %v1080, %v1081
        %v1083 = vadd.f32 %v1082, %v364
        %v1084 = vsel %vm429, %v1083, 0.0
        %1085 = vadd.xlane.f32.xlu0 %v1084
        %v1086 = vpop.xlane.xlu0 %1085
        %v1087 = vrcp.pop 32.0
        %v1088 = vmul.f32 32.0, %v1087
        %v1089 = vsub.f32 1.0, %v1088
        %v1090 = vmul.f32 %v1087, %v1089
        %v1091 = vadd.f32 %v1087, %v1090
        %vm1092 = vweird.f32 %v1087
        %v1093 = vsel %vm1092, %v1087, %v1091
        %v1094 = vmul.f32 %v1086, %v1093
        %v1095 = vsub.f32 %v1083, %v1094
        %v1096 = vmul.f32 %v1095, %v1095
        %v1097 = vsel %vm429, %v1096, 0.0
        %1098 = vadd.xlane.f32.xlu0 %v1097
        %v1099 = vpop.xlane.xlu0 %1098
        %v1100 = vmul.f32 %v1099, %v1093
        %v1101 = vadd.f32 %v1100, 1e-05
        %v1102 = vrsqrt.pop %v1101
        %v1103 = vmul.f32 %v1102, %v1101
        %v1104 = vmul.f32 %v1103, %v1102
        %v1105 = vmul.f32 0.5, %v1104
        %v1106 = vsub.f32 1.5, %v1105
        %v1107 = vmul.f32 %v1102, %v1106
        %vm1108 = vweird.f32 %v1101
        %vm1109 = vweird.f32 %v1102
        %vm1110 = vmor %vm1108, %vm1109
        %v1111 = vsel %vm1110, %v1102, %v1107
        %v1112 = vmul.f32 %v1095, %v1111
        %v1113 = vperm.slane %v367, 1
        %v1114 = vmul.f32 %v1112, %v1113
        %v1115 = vperm.slane %v367, 2
        %v1116 = vadd.f32 %v1114, %v1115
        %v1117 = vpack.c.bf16 %v1116, %v1116
        %v1118 = vld [vmem:[#allocation5] sm:$0xf]
        %v1119 = vld [vmem:[#allocation5 + $0x4] sm:$0xf]
        %v1120 = vld [vmem:[#allocation5 + $0x8] sm:$0xf]
        %v1121 = vld [vmem:[#allocation5 + $0xc] sm:$0xf]
        %v1122 = vld [vmem:[%s7] sm:$0x1]
        %v1124 = vperm.slane %v1122, 0
        %v1130 = vunpack.c.l.b16 %v1118
        %v1131 = vunpack.c.l.b16 %v1119
        %v1132 = vunpack.c.l.b16 %v1120
        %v1133 = vunpack.c.l.b16 %v1121
        %v1134 = vpack.c.b16 %v1131, %v1130
        %v1135 = vpack.c.b16 %v1133, %v1132
        %v1139 = vsel %vm429, %v1117, 0
        %1141 = vmatpush.bf16.msra.mxu0 0
        %1142 = vmatpush.bf16.msra.mxu0 0
        %1143 = vmatpush.bf16.msra.mxu0 0
        %1144 = vmatpush.bf16.msra.mxu0 0
        %1145 = vmatpush.bf16.msra.mxu0 0
        %1146 = vmatpush.bf16.msra.mxu0 0
        %1147 = vmatpush.bf16.msra.mxu0 %v1135
        %1148 = vmatpush.bf16.msra.mxu0 %v1134
        %1149 = vmatmul.bf16.gmra.mxu0 %v1139
        %v1150 = vpop.f32.mrf.mxu0
        %v1151 = vadd.f32 %v1124, %v1150
        %v1152 = vpop.f32.mrf.mxu0
        %1153 = vdwg.mxu0
        %v1154 = vmax.f32 %v1151, 0.0
        %v1155 = vpack.c.bf16 %v1154, %v1154
        %v1156 = vld [vmem:[%s5] sm:$0xf]
        %v1157 = vld [vmem:[%s5 + $0x4] sm:$0xf]
        %v1158 = vld [vmem:[%s5 + $0x8] sm:$0xf]
        %v1159 = vld [vmem:[%s5 + $0xc] sm:$0xf]
        %v1160 = vld [vmem:[%s5 + $0x10] sm:$0xf]
        %v1161 = vld [vmem:[%s5 + $0x14] sm:$0xf]
        %v1162 = vld [vmem:[%s5 + $0x18] sm:$0xf]
        %v1163 = vld [vmem:[%s5 + $0x1c] sm:$0xf]
        %v1164 = vld [vmem:[%s5 + $0x20] sm:$0xf]
        %v1165 = vld [vmem:[%s5 + $0x24] sm:$0xf]
        %v1166 = vld [vmem:[%s5 + $0x28] sm:$0xf]
        %v1167 = vld [vmem:[%s5 + $0x2c] sm:$0xf]
        %v1168 = vld [vmem:[%s5 + $0x30] sm:$0xf]
        %v1169 = vld [vmem:[%s5 + $0x34] sm:$0xf]
        %v1170 = vld [vmem:[%s5 + $0x38] sm:$0xf]
        %v1171 = vld [vmem:[%s5 + $0x3c] sm:$0xf]
        %v1172 = vperm.slane %v367, 3
        %v1189 = vunpack.c.l.b16 %v1156
        %v1190 = vunpack.c.l.b16 %v1157
        %v1191 = vunpack.c.l.b16 %v1158
        %v1192 = vunpack.c.l.b16 %v1159
        %v1193 = vunpack.c.l.b16 %v1160
        %v1194 = vunpack.c.l.b16 %v1161
        %v1195 = vunpack.c.l.b16 %v1162
        %v1196 = vunpack.c.l.b16 %v1163
        %v1197 = vunpack.c.l.b16 %v1164
        %v1198 = vunpack.c.l.b16 %v1165
        %v1199 = vunpack.c.l.b16 %v1166
        %v1200 = vunpack.c.l.b16 %v1167
        %v1201 = vunpack.c.l.b16 %v1168
        %v1202 = vunpack.c.l.b16 %v1169
        %v1203 = vunpack.c.l.b16 %v1170
        %v1204 = vunpack.c.l.b16 %v1171
        %v1205 = vpack.c.b16 %v1190, %v1189
        %v1206 = vpack.c.b16 %v1192, %v1191
        %v1207 = vpack.c.b16 %v1194, %v1193
        %v1208 = vpack.c.b16 %v1196, %v1195
        %v1209 = vpack.c.b16 %v1198, %v1197
        %v1210 = vpack.c.b16 %v1200, %v1199
        %v1211 = vpack.c.b16 %v1202, %v1201
        %v1212 = vpack.c.b16 %v1204, %v1203
        %1221 = vmatpush.bf16.msra.mxu0 %v1212
        %1222 = vmatpush.bf16.msra.mxu0 %v1211
        %1223 = vmatpush.bf16.msra.mxu0 %v1210
        %1224 = vmatpush.bf16.msra.mxu0 %v1209
        %1225 = vmatpush.bf16.msra.mxu0 %v1208
        %1226 = vmatpush.bf16.msra.mxu0 %v1207
        %1227 = vmatpush.bf16.msra.mxu0 %v1206
        %1228 = vmatpush.bf16.msra.mxu0 %v1205
        %1229 = vmatmul.bf16.gmra.mxu0 %v1155
        %v1230 = vpop.f32.mrf.mxu0
        %v1231 = vadd.f32 %v1172, %v1230
        %v1232 = vpop.f32.mrf.mxu0
        %1233 = vdwg.mxu0
        %v1234 = vadd.f32 %v1231, %v1116
        %v1235 = vsel %vm429, %v1234, 0.0
        %1236 = vadd.xlane.f32.xlu0 %v1235
        %v1237 = vpop.xlane.xlu0 %1236
        %v1238 = vmul.f32 %v1237, %v1093
        %v1239 = vsub.f32 %v1234, %v1238
        %v1240 = vmul.f32 %v1239, %v1239
        %v1241 = vsel %vm429, %v1240, 0.0
        %1242 = vadd.xlane.f32.xlu0 %v1241
        %v1243 = vpop.xlane.xlu0 %1242
        %v1244 = vmul.f32 %v1243, %v1093
        %v1245 = vadd.f32 %v1244, 1e-05
        %v1246 = vrsqrt.pop %v1245
        %v1247 = vmul.f32 %v1246, %v1245
        %v1248 = vmul.f32 %v1247, %v1246
        %v1249 = vmul.f32 0.5, %v1248
        %v1250 = vsub.f32 1.5, %v1249
        %v1251 = vmul.f32 %v1246, %v1250
        %vm1252 = vweird.f32 %v1245
        %vm1253 = vweird.f32 %v1246
        %vm1254 = vmor %vm1252, %vm1253
        %v1255 = vsel %vm1254, %v1246, %v1251
        %v1256 = vmul.f32 %v1239, %v1255
        %v1257 = vperm.slane %v367, 4
        %v1258 = vmul.f32 %v1256, %v1257
        %v1259 = vperm.slane %v367, 5
        %v1260 = vadd.f32 %v1258, %v1259
        %1261 = vst.msk [vmem:[%s355] sm:$0xff] %vm429, %v1260
        %s1262 = sand.u32 %s210, 1
        %s1263 = scalar_lea.sflag [#allocation4], %s1262
        %s1264 = sand.u32 %s210, 1
        %s1265 = smul.addr %s1264, 8
        %s1266 = scalar_lea.vmem [#allocation8], %s1265
        // Predicated region
        $region65: #{tpu_custom_call.1} parent=51 // pred_check
          %p1267 = pneg %p220
        $region66: #{tpu_custom_call.1} parent=51 // pred_check_branch
          %1269 = sbr.rel (%p1267) target = $region68
        $region67: #{tpu_custom_call.1} parent=51 // pred_region
          %1271 = vsyncadd %s1263, 0
          %s1272 = smul.addr %s24, 8
          %s1273 = scalar_lea.hbm %s8, %s1272
          %s1275 = sshll.u32 %s1266, 4
          %s1276 = int_to_ptr.vmem [resolvable:$true] %s1275
          %s1277 = sshll.u32 %s1273, 4
          %s1278 = int_to_ptr.hbm [resolvable:$true] %s1277
          %1280 = dma.vmem_to_hbm [thread:$0]  %s1276, 128, %s1278, %s1263
        $region68: #{tpu_custom_call.1} parent=51 // pred_fallthru
          _
      $region52: #{tpu_custom_call.1} parent=5 // pred_fallthru
        _
      %p1281 = scmp.le.s32.totalorder 2, %s19
      // Predicated region
      $region69: #{tpu_custom_call.1} parent=5 // pred_check
        %p1282 = pneg %p1281
      $region70: #{tpu_custom_call.1} parent=5 // pred_check_branch
        %1284 = sbr.rel (%p1282) target = $region72
      $region71: #{tpu_custom_call.1} parent=5 // pred_region
        %s1285 = ssub.s32 %s19, 2
        // Predicated region
        $region73: #{tpu_custom_call.1} parent=71 // pred_check
          %p1286 = pneg %p226
        $region74: #{tpu_custom_call.1} parent=71 // pred_check_branch
          %1288 = sbr.rel (%p1286) target = $region76
        $region75: #{tpu_custom_call.1} parent=71 // pred_region
          %s1289 = sand.u32 %s211, 1
          %s1290 = scalar_lea.sflag [#allocation4], %s1289
          %s1291 = sand.u32 %s211, 1
          %s1292 = smul.addr %s1291, 8
          %s1293 = scalar_lea.vmem [#allocation8], %s1292
          %1295 = dma.done %s1290, 128
        $region76: #{tpu_custom_call.1} parent=71 // pred_fallthru
          _
      $region72: #{tpu_custom_call.1} parent=5 // pred_fallthru
        _
    $region6: #{tpu_custom_call.1} parent=1 // loop_footer
      %s23 = sadd.s32 1, %s19
    $region7: #{tpu_custom_call.1} parent=1 // loop_footer_branch
      %18 = sbr.rel target = $region3
    $region8: #{tpu_custom_call.1} parent=1 // loop_exit
      _
    %1296 = vsyncpa [#allocation3], 1
    %s1297 = scalar_lea.sflag [#allocation3], 1
    %1298 = vsyncpa %s1297, 1
    %1299 = vsyncpa [#allocation6], 1
    %1300 = vsyncpa [#allocation4], 1
    %s1301 = scalar_lea.sflag [#allocation4], 1
    %1302 = vsyncpa %s1301, 1

</llo_original>
